<compile_context>
chip_gen: v7x
topology: tpu7x:2x2x1
jax: 0.10.0
libtpu: 0.0.40
codegen_flags: <defaults>
</compile_context>

<pallas_src>
import jax
import jax.numpy as jnp
from jax.experimental import pallas as pl
from jax.experimental.pallas import tpu as pltpu

HIDDEN = 32
LEAKY_SLOPE = 0.01  # F.leaky_relu default negative_slope
LANE = 128
SUBLANE = 8


def _round_up(a, b):
    return (a + b - 1) // b * b


def mlp_encoder_kernel(x_ref, w1_ref, b1_ref, w2_ref, b2_ref, a_ref, w3_ref, b3_ref, o_ref):
    # Hoist the (1, C) bias/alpha reads once per body (JAX does not CSE broadcast_in_dim).
    b1 = b1_ref[...]
    b2 = b2_ref[...]
    alpha = a_ref[...]
    b3 = b3_ref[...]

    x = x_ref[...].astype(jnp.float32)  # f32 math in-kernel even with bf16 I/O

    # input linear: (TN, in_dim) @ (in_dim, 32) + (1, 32), then leaky_relu(0.01)
    h = jnp.dot(x, w1_ref[...], preferred_element_type=jnp.float32) + b1
    h = jnp.where(h >= 0, h, LEAKY_SLOPE * h)

    # hidden linear: (TN, 32) @ (32, 32) + (1, 32), then PReLU with per-channel slope
    h = jnp.dot(h, w2_ref[...], preferred_element_type=jnp.float32) + b2
    h = jnp.where(h >= 0, h, alpha * h)

    # output linear: (TN, 32) @ (32, z_pad) + (1, z_pad); z_pad is lane-dense (multiple of 128)
    out = jnp.dot(h, w3_ref[...], preferred_element_type=jnp.float32) + b3
    o_ref[...] = out.astype(o_ref.dtype)


def _build_call(tile, in_dim, z_pad, n_pad, io_dtype, single_buffer_params):
    const = lambda i: (0, 0)
    pm = dict(pipeline_mode=pl.Buffered(1)) if single_buffer_params else {}
    param_spec = lambda shape: pl.BlockSpec(shape, const, **pm)

    in_specs = [
        pl.BlockSpec((tile, in_dim), lambda i: (i, 0)),  # x row tile
        param_spec((in_dim, HIDDEN)),                    # w1
        param_spec((1, HIDDEN)),                         # b1
        param_spec((HIDDEN, HIDDEN)),                    # w2
        param_spec((1, HIDDEN)),                         # b2
        param_spec((1, HIDDEN)),                         # prelu alpha
        param_spec((HIDDEN, z_pad)),                     # w3 (zero-padded cols)
        param_spec((1, z_pad)),                          # b3 (zero-padded)
    ]

    # VMEM budget: double-buffered x/out tiles + resident params + headroom, clamped to sane range.
    itemsize = jnp.dtype(io_dtype).itemsize
    act_bytes = 2 * tile * (in_dim + z_pad) * itemsize
    par_bytes = 4 * (in_dim * HIDDEN + HIDDEN * HIDDEN + HIDDEN * z_pad + 3 * HIDDEN + z_pad)
    vmem_limit = int(min(max(2 * (act_bytes + par_bytes) + (4 << 20), 16 << 20), 96 << 20))

    return pl.pallas_call(
        mlp_encoder_kernel,
        out_shape=jax.ShapeDtypeStruct((n_pad, z_pad), io_dtype),
        grid_spec=pltpu.PrefetchScalarGridSpec(
            num_scalar_prefetch=0,
            grid=(n_pad // tile,),
            in_specs=in_specs,
            out_specs=pl.BlockSpec((tile, z_pad), lambda i: (i, 0)),
        ),
        compiler_params=pltpu.CompilerParams(
            dimension_semantics=("parallel",),
            vmem_limit_bytes=vmem_limit,
        ),
    )


def mlp_encoder(x, params, *, tile_n=1024, io_dtype=None):
    """x: (N, in_dim). params: dict of weights/biases. Returns (N, z_dim) in io_dtype (default x.dtype)."""
    N, in_dim = x.shape
    io_dtype = jnp.dtype(io_dtype or x.dtype)

    w1, b1 = params["w1"], params["b1"]
    w2, b2 = params["w2"], params["b2"]
    alpha = params["alpha"]
    w3, b3 = params["w3"], params["b3"]
    z_dim = w3.shape[1]

    # Lane-dense output: zero-pad output features to a multiple of 128; sliced off below.
    z_pad = _round_up(z_dim, LANE)
    if z_pad != z_dim:
        w3 = jnp.pad(w3, ((0, 0), (0, z_pad - z_dim)))
        b3 = jnp.pad(b3, ((0, 0), (0, z_pad - z_dim)))

    # Row tile: as big as requested (amortize per-step overhead), but keep >=2 grid steps
    # when N allows so both TensorCores get work on v7x.
    if N >= 2 * SUBLANE:
        tile = max(SUBLANE, min(int(tile_n), _round_up(pl.cdiv(N, 2), SUBLANE)))
    else:
        tile = _round_up(max(N, 1), SUBLANE)
    n_pad = _round_up(N, tile)
    if n_pad != N:
        x = jnp.pad(x, ((0, n_pad - N), (0, 0)))  # padded rows are discarded after the call

    x = x.astype(io_dtype)  # bf16 I/O halves HBM traffic; kernel math stays f32

    args = (x, w1, b1, w2, b2, alpha, w3, b3)
    try:
        out = _build_call(tile, in_dim, z_pad, n_pad, io_dtype, single_buffer_params=True)(*args)
    except Exception:
        # Fallback if this jax build rejects pl.Buffered(1) on the resident parameter blocks.
        out = _build_call(tile, in_dim, z_pad, n_pad, io_dtype, single_buffer_params=False)(*args)

    return out[:N, :z_dim]


def init_params(key, in_dim, z_dim):
    """Deterministic init mimicking nn.Linear (uniform +-1/sqrt(fan_in)) and PReLU(init=0.25)."""
    ks = jax.random.split(key, 6)

    def linear(kw, kb, fan_in, fan_out):
        bound = 1.0 / jnp.sqrt(fan_in)
        w = jax.random.uniform(kw, (fan_in, fan_out), jnp.float32, -bound, bound)
        b = jax.random.uniform(kb, (1, fan_out), jnp.float32, -bound, bound)
        return w, b

    w1, b1 = linear(ks[0], ks[1], in_dim, HIDDEN)
    w2, b2 = linear(ks[2], ks[3], HIDDEN, HIDDEN)
    w3, b3 = linear(ks[4], ks[5], HIDDEN, z_dim)
    alpha = jnp.full((1, HIDDEN), 0.25, jnp.float32)  # nn.PReLU(32) default init
    return dict(w1=w1, b1=b1, w2=w2, b2=b2, alpha=alpha, w3=w3, b3=b3)


def mlp_encoder_ref(x, p):
    """Pure-JAX reference of the PyTorch forward."""
    h = x @ p["w1"] + p["b1"]
    h = jnp.where(h >= 0, h, LEAKY_SLOPE * h)
    h = h @ p["w2"] + p["b2"]
    h = jnp.where(h >= 0, h, p["alpha"] * h)
    return h @ p["w3"] + p["b3"]


if __name__ == "__main__":
    key = jax.random.PRNGKey(0)
    k_x, k_p = jax.random.split(key)

    # Small shapes consistent with the module: encode N x in_dim -> N x z_dim.
    # N intentionally not a multiple of the tile/sublane to exercise the row-padding path.
    N, in_dim, z_dim = 70, 16, 8
    x = jax.random.normal(k_x, (N, in_dim), jnp.float32)
    params = init_params(k_p, in_dim, z_dim)

    ref = mlp_encoder_ref(x, params)

    # f32 I/O path
    out = jax.block_until_ready(mlp_encoder(x, params, tile_n=1024))
    assert out.shape == (N, z_dim)
    assert jnp.allclose(out, ref, atol=1e-5, rtol=1e-5), "f32 mismatch vs reference"

    # bf16 I/O path (halved HBM traffic; math stays f32 inside the kernel)
    out_bf16 = jax.block_until_ready(mlp_encoder(x, params, tile_n=1024, io_dtype=jnp.bfloat16))
    ref_bf16 = mlp_encoder_ref(x.astype(jnp.bfloat16).astype(jnp.float32), params)
    assert out_bf16.shape == (N, z_dim)
    assert jnp.allclose(out_bf16.astype(jnp.float32), ref_bf16, atol=2e-2, rtol=2e-2), "bf16 mismatch"

    print("KERNEL_OK")
</pallas_src>

<mosaic_0001>
module attributes {stable_mosaic.version = 11 : i64} {
  func.func @mlp_encoder_kernel(%arg0: i32, %arg1: memref<40x16xf32, #tpu.memory_space<vmem>>, %arg2: memref<16x32xf32, #tpu.memory_space<vmem>>, %arg3: memref<1x32xf32, #tpu.memory_space<vmem>>, %arg4: memref<32x32xf32, #tpu.memory_space<vmem>>, %arg5: memref<1x32xf32, #tpu.memory_space<vmem>>, %arg6: memref<1x32xf32, #tpu.memory_space<vmem>>, %arg7: memref<32x128xf32, #tpu.memory_space<vmem>>, %arg8: memref<1x128xf32, #tpu.memory_space<vmem>>, %arg9: memref<40x128xf32, #tpu.memory_space<vmem>>) attributes {dimension_semantics = [#tpu.dimension_semantics<parallel>], iteration_bounds = array<i64: 2>, scalar_prefetch = 0 : i64, scratch_operands = 0 : i64, tpu.core_type = #tpu.core_type<tc>, window_params = [{transform_indices = @transform_0, window_bounds = array<i64: 40, 16>}, {pipeline_mode = #tpu.pipeline_mode<synchronous>, transform_indices = @transform_1, window_bounds = array<i64: 16, 32>}, {pipeline_mode = #tpu.pipeline_mode<synchronous>, transform_indices = @transform_2, window_bounds = array<i64: 1, 32>}, {pipeline_mode = #tpu.pipeline_mode<synchronous>, transform_indices = @transform_3, window_bounds = array<i64: 32, 32>}, {pipeline_mode = #tpu.pipeline_mode<synchronous>, transform_indices = @transform_4, window_bounds = array<i64: 1, 32>}, {pipeline_mode = #tpu.pipeline_mode<synchronous>, transform_indices = @transform_5, window_bounds = array<i64: 1, 32>}, {pipeline_mode = #tpu.pipeline_mode<synchronous>, transform_indices = @transform_6, window_bounds = array<i64: 32, 128>}, {pipeline_mode = #tpu.pipeline_mode<synchronous>, transform_indices = @transform_7, window_bounds = array<i64: 1, 128>}, {transform_indices = @transform_8, window_bounds = array<i64: 40, 128>}]} {
    %c0 = arith.constant 0 : index
    %c0_0 = arith.constant 0 : index
    %0 = vector.load %arg3[%c0, %c0_0] : memref<1x32xf32, #tpu.memory_space<vmem>>, vector<1x32xf32>
    %c0_1 = arith.constant 0 : index
    %c0_2 = arith.constant 0 : index
    %1 = vector.load %arg5[%c0_1, %c0_2] : memref<1x32xf32, #tpu.memory_space<vmem>>, vector<1x32xf32>
    %c0_3 = arith.constant 0 : index
    %c0_4 = arith.constant 0 : index
    %2 = vector.load %arg6[%c0_3, %c0_4] : memref<1x32xf32, #tpu.memory_space<vmem>>, vector<1x32xf32>
    %c0_5 = arith.constant 0 : index
    %c0_6 = arith.constant 0 : index
    %3 = vector.load %arg8[%c0_5, %c0_6] : memref<1x128xf32, #tpu.memory_space<vmem>>, vector<1x128xf32>
    %c0_7 = arith.constant 0 : index
    %c0_8 = arith.constant 0 : index
    %4 = vector.load %arg1[%c0_7, %c0_8] : memref<40x16xf32, #tpu.memory_space<vmem>>, vector<40x16xf32>
    %c0_9 = arith.constant 0 : index
    %c0_10 = arith.constant 0 : index
    %5 = vector.load %arg2[%c0_9, %c0_10] : memref<16x32xf32, #tpu.memory_space<vmem>>, vector<16x32xf32>
    %cst = arith.constant dense<0.000000e+00> : vector<40x32xf32>
    %6 = tpu.matmul %4, %5, %cst {dimension_numbers = #tpu.dot_dimension_numbers<[1], [0], [0], [1], [0, 0, 1, 1], [], []>} : vector<40x16xf32>, vector<16x32xf32>, vector<40x32xf32> -> vector<40x32xf32>
    %7 = vector.broadcast %0 : vector<1x32xf32> to vector<40x32xf32>
    %8 = arith.addf %6, %7 : vector<40x32xf32>
    %cst_11 = arith.constant 0.000000e+00 : f32
    %9 = vector.broadcast %cst_11 : f32 to vector<40x32xf32>
    %10 = arith.cmpf oge, %8, %9 : vector<40x32xf32>
    %cst_12 = arith.constant 0.00999999977 : f32
    %11 = vector.broadcast %cst_12 : f32 to vector<40x32xf32>
    %12 = arith.mulf %11, %8 : vector<40x32xf32>
    %13 = arith.select %10, %8, %12 : vector<40x32xi1>, vector<40x32xf32>
    %c0_13 = arith.constant 0 : index
    %c0_14 = arith.constant 0 : index
    %14 = vector.load %arg4[%c0_13, %c0_14] : memref<32x32xf32, #tpu.memory_space<vmem>>, vector<32x32xf32>
    %cst_15 = arith.constant dense<0.000000e+00> : vector<40x32xf32>
    %15 = tpu.matmul %13, %14, %cst_15 {dimension_numbers = #tpu.dot_dimension_numbers<[1], [0], [0], [1], [0, 0, 1, 1], [], []>} : vector<40x32xf32>, vector<32x32xf32>, vector<40x32xf32> -> vector<40x32xf32>
    %16 = vector.broadcast %1 : vector<1x32xf32> to vector<40x32xf32>
    %17 = arith.addf %15, %16 : vector<40x32xf32>
    %cst_16 = arith.constant 0.000000e+00 : f32
    %18 = vector.broadcast %cst_16 : f32 to vector<40x32xf32>
    %19 = arith.cmpf oge, %17, %18 : vector<40x32xf32>
    %20 = vector.broadcast %2 : vector<1x32xf32> to vector<40x32xf32>
    %21 = arith.mulf %20, %17 : vector<40x32xf32>
    %22 = arith.select %19, %17, %21 : vector<40x32xi1>, vector<40x32xf32>
    %c0_17 = arith.constant 0 : index
    %c0_18 = arith.constant 0 : index
    %23 = vector.load %arg7[%c0_17, %c0_18] : memref<32x128xf32, #tpu.memory_space<vmem>>, vector<32x128xf32>
    %cst_19 = arith.constant dense<0.000000e+00> : vector<40x128xf32>
    %24 = tpu.matmul %22, %23, %cst_19 {dimension_numbers = #tpu.dot_dimension_numbers<[1], [0], [0], [1], [0, 0, 1, 1], [], []>} : vector<40x32xf32>, vector<32x128xf32>, vector<40x128xf32> -> vector<40x128xf32>
    %25 = vector.broadcast %3 : vector<1x128xf32> to vector<40x128xf32>
    %26 = arith.addf %24, %25 : vector<40x128xf32>
    %c0_20 = arith.constant 0 : index
    %c0_21 = arith.constant 0 : index
    %27 = vector.load %arg9[%c0_20, %c0_21] : memref<40x128xf32, #tpu.memory_space<vmem>>, vector<40x128xf32>
    tpu.vector_store %arg9[%c0_20, %c0_21], %26 {strides = array<i32>} : memref<40x128xf32, #tpu.memory_space<vmem>>, vector<40x128xf32>,
    return
  }
  func.func @transform_0(%arg0: i32) -> (i32, i32) {
    %c0_i32 = arith.constant 0 : i32
    %c0_i32_0 = arith.constant 0 : i32
    return %arg0, %c0_i32 : i32, i32
  }
  func.func @transform_1(%arg0: i32) -> (i32, i32) {
    %c0_i32 = arith.constant 0 : i32
    %c0_i32_0 = arith.constant 0 : i32
    %c0_i32_1 = arith.constant 0 : i32
    return %c0_i32, %c0_i32_0 : i32, i32
  }
  func.func @transform_2(%arg0: i32) -> (i32, i32) {
    %c0_i32 = arith.constant 0 : i32
    %c0_i32_0 = arith.constant 0 : i32
    %c0_i32_1 = arith.constant 0 : i32
    return %c0_i32, %c0_i32_0 : i32, i32
  }
  func.func @transform_3(%arg0: i32) -> (i32, i32) {
    %c0_i32 = arith.constant 0 : i32
    %c0_i32_0 = arith.constant 0 : i32
    %c0_i32_1 = arith.constant 0 : i32
    return %c0_i32, %c0_i32_0 : i32, i32
  }
  func.func @transform_4(%arg0: i32) -> (i32, i32) {
    %c0_i32 = arith.constant 0 : i32
    %c0_i32_0 = arith.constant 0 : i32
    %c0_i32_1 = arith.constant 0 : i32
    return %c0_i32, %c0_i32_0 : i32, i32
  }
  func.func @transform_5(%arg0: i32) -> (i32, i32) {
    %c0_i32 = arith.constant 0 : i32
    %c0_i32_0 = arith.constant 0 : i32
    %c0_i32_1 = arith.constant 0 : i32
    return %c0_i32, %c0_i32_0 : i32, i32
  }
  func.func @transform_6(%arg0: i32) -> (i32, i32) {
    %c0_i32 = arith.constant 0 : i32
    %c0_i32_0 = arith.constant 0 : i32
    %c0_i32_1 = arith.constant 0 : i32
    return %c0_i32, %c0_i32_0 : i32, i32
  }
  func.func @transform_7(%arg0: i32) -> (i32, i32) {
    %c0_i32 = arith.constant 0 : i32
    %c0_i32_0 = arith.constant 0 : i32
    %c0_i32_1 = arith.constant 0 : i32
    return %c0_i32, %c0_i32_0 : i32, i32
  }
  func.func @transform_8(%arg0: i32) -> (i32, i32) {
    %c0_i32 = arith.constant 0 : i32
    %c0_i32_0 = arith.constant 0 : i32
    return %arg0, %c0_i32 : i32, i32
  }
}

module attributes {stable_mosaic.version = 11 : i64} {
  func.func @mlp_encoder_kernel(%arg0: i32, %arg1: memref<40x16xf32, #tpu.memory_space<vmem>>, %arg2: memref<16x32xf32, #tpu.memory_space<vmem>>, %arg3: memref<1x32xf32, #tpu.memory_space<vmem>>, %arg4: memref<32x32xf32, #tpu.memory_space<vmem>>, %arg5: memref<1x32xf32, #tpu.memory_space<vmem>>, %arg6: memref<1x32xf32, #tpu.memory_space<vmem>>, %arg7: memref<32x128xf32, #tpu.memory_space<vmem>>, %arg8: memref<1x128xf32, #tpu.memory_space<vmem>>, %arg9: memref<40x128xf32, #tpu.memory_space<vmem>>) attributes {dimension_semantics = [#tpu.dimension_semantics<parallel>], iteration_bounds = array<i64: 2>, scalar_prefetch = 0 : i64, scratch_operands = 0 : i64, tpu.core_type = #tpu.core_type<tc>, window_params = [{transform_indices = @transform_0, window_bounds = array<i64: 40, 16>}, {pipeline_mode = #tpu.pipeline_mode<synchronous>, transform_indices = @transform_1, window_bounds = array<i64: 16, 32>}, {pipeline_mode = #tpu.pipeline_mode<synchronous>, transform_indices = @transform_2, window_bounds = array<i64: 1, 32>}, {pipeline_mode = #tpu.pipeline_mode<synchronous>, transform_indices = @transform_3, window_bounds = array<i64: 32, 32>}, {pipeline_mode = #tpu.pipeline_mode<synchronous>, transform_indices = @transform_4, window_bounds = array<i64: 1, 32>}, {pipeline_mode = #tpu.pipeline_mode<synchronous>, transform_indices = @transform_5, window_bounds = array<i64: 1, 32>}, {pipeline_mode = #tpu.pipeline_mode<synchronous>, transform_indices = @transform_6, window_bounds = array<i64: 32, 128>}, {pipeline_mode = #tpu.pipeline_mode<synchronous>, transform_indices = @transform_7, window_bounds = array<i64: 1, 128>}, {transform_indices = @transform_8, window_bounds = array<i64: 40, 128>}]} {
    %c0 = arith.constant 0 : index
    %c0_0 = arith.constant 0 : index
    %0 = vector.load %arg3[%c0, %c0_0] : memref<1x32xf32, #tpu.memory_space<vmem>>, vector<1x32xf32>
    %c0_1 = arith.constant 0 : index
    %c0_2 = arith.constant 0 : index
    %1 = vector.load %arg5[%c0_1, %c0_2] : memref<1x32xf32, #tpu.memory_space<vmem>>, vector<1x32xf32>
    %c0_3 = arith.constant 0 : index
    %c0_4 = arith.constant 0 : index
    %2 = vector.load %arg6[%c0_3, %c0_4] : memref<1x32xf32, #tpu.memory_space<vmem>>, vector<1x32xf32>
    %c0_5 = arith.constant 0 : index
    %c0_6 = arith.constant 0 : index
    %3 = vector.load %arg8[%c0_5, %c0_6] : memref<1x128xf32, #tpu.memory_space<vmem>>, vector<1x128xf32>
    %c0_7 = arith.constant 0 : index
    %c0_8 = arith.constant 0 : index
    %4 = vector.load %arg1[%c0_7, %c0_8] : memref<40x16xf32, #tpu.memory_space<vmem>>, vector<40x16xf32>
    %c0_9 = arith.constant 0 : index
    %c0_10 = arith.constant 0 : index
    %5 = vector.load %arg2[%c0_9, %c0_10] : memref<16x32xf32, #tpu.memory_space<vmem>>, vector<16x32xf32>
    %cst = arith.constant dense<0.000000e+00> : vector<40x32xf32>
    %6 = tpu.matmul %4, %5, %cst {dimension_numbers = #tpu.dot_dimension_numbers<[1], [0], [0], [1], [0, 0, 1, 1], [], []>} : vector<40x16xf32>, vector<16x32xf32>, vector<40x32xf32> -> vector<40x32xf32>
    %7 = vector.broadcast %0 : vector<1x32xf32> to vector<40x32xf32>
    %8 = arith.addf %6, %7 : vector<40x32xf32>
    %cst_11 = arith.constant 0.000000e+00 : f32
    %9 = vector.broadcast %cst_11 : f32 to vector<40x32xf32>
    %10 = arith.cmpf oge, %8, %9 : vector<40x32xf32>
    %cst_12 = arith.constant 0.00999999977 : f32
    %11 = vector.broadcast %cst_12 : f32 to vector<40x32xf32>
    %12 = arith.mulf %11, %8 : vector<40x32xf32>
    %13 = arith.select %10, %8, %12 : vector<40x32xi1>, vector<40x32xf32>
    %c0_13 = arith.constant 0 : index
    %c0_14 = arith.constant 0 : index
    %14 = vector.load %arg4[%c0_13, %c0_14] : memref<32x32xf32, #tpu.memory_space<vmem>>, vector<32x32xf32>
    %cst_15 = arith.constant dense<0.000000e+00> : vector<40x32xf32>
    %15 = tpu.matmul %13, %14, %cst_15 {dimension_numbers = #tpu.dot_dimension_numbers<[1], [0], [0], [1], [0, 0, 1, 1], [], []>} : vector<40x32xf32>, vector<32x32xf32>, vector<40x32xf32> -> vector<40x32xf32>
    %16 = vector.broadcast %1 : vector<1x32xf32> to vector<40x32xf32>
    %17 = arith.addf %15, %16 : vector<40x32xf32>
    %cst_16 = arith.constant 0.000000e+00 : f32
    %18 = vector.broadcast %cst_16 : f32 to vector<40x32xf32>
    %19 = arith.cmpf oge, %17, %18 : vector<40x32xf32>
    %20 = vector.broadcast %2 : vector<1x32xf32> to vector<40x32xf32>
    %21 = arith.mulf %20, %17 : vector<40x32xf32>
    %22 = arith.select %19, %17, %21 : vector<40x32xi1>, vector<40x32xf32>
    %c0_17 = arith.constant 0 : index
    %c0_18 = arith.constant 0 : index
    %23 = vector.load %arg7[%c0_17, %c0_18] : memref<32x128xf32, #tpu.memory_space<vmem>>, vector<32x128xf32>
    %cst_19 = arith.constant dense<0.000000e+00> : vector<40x128xf32>
    %24 = tpu.matmul %22, %23, %cst_19 {dimension_numbers = #tpu.dot_dimension_numbers<[1], [0], [0], [1], [0, 0, 1, 1], [], []>} : vector<40x32xf32>, vector<32x128xf32>, vector<40x128xf32> -> vector<40x128xf32>
    %25 = vector.broadcast %3 : vector<1x128xf32> to vector<40x128xf32>
    %26 = arith.addf %24, %25 : vector<40x128xf32>
    %c0_20 = arith.constant 0 : index
    %c0_21 = arith.constant 0 : index
    %27 = vector.load %arg9[%c0_20, %c0_21] : memref<40x128xf32, #tpu.memory_space<vmem>>, vector<40x128xf32>
    tpu.vector_store %arg9[%c0_20, %c0_21], %26 {strides = array<i32>} : memref<40x128xf32, #tpu.memory_space<vmem>>, vector<40x128xf32>,
    return
  }
  func.func @transform_0(%arg0: i32) -> (i32, i32) {
    %c0_i32 = arith.constant 0 : i32
    %c0_i32_0 = arith.constant 0 : i32
    return %arg0, %c0_i32 : i32, i32
  }
  func.func @transform_1(%arg0: i32) -> (i32, i32) {
    %c0_i32 = arith.constant 0 : i32
    %c0_i32_0 = arith.constant 0 : i32
    %c0_i32_1 = arith.constant 0 : i32
    return %c0_i32, %c0_i32_0 : i32, i32
  }
  func.func @transform_2(%arg0: i32) -> (i32, i32) {
    %c0_i32 = arith.constant 0 : i32
    %c0_i32_0 = arith.constant 0 : i32
    %c0_i32_1 = arith.constant 0 : i32
    return %c0_i32, %c0_i32_0 : i32, i32
  }
  func.func @transform_3(%arg0: i32) -> (i32, i32) {
    %c0_i32 = arith.constant 0 : i32
    %c0_i32_0 = arith.constant 0 : i32
    %c0_i32_1 = arith.constant 0 : i32
    return %c0_i32, %c0_i32_0 : i32, i32
  }
  func.func @transform_4(%arg0: i32) -> (i32, i32) {
    %c0_i32 = arith.constant 0 : i32
    %c0_i32_0 = arith.constant 0 : i32
    %c0_i32_1 = arith.constant 0 : i32
    return %c0_i32, %c0_i32_0 : i32, i32
  }
  func.func @transform_5(%arg0: i32) -> (i32, i32) {
    %c0_i32 = arith.constant 0 : i32
    %c0_i32_0 = arith.constant 0 : i32
    %c0_i32_1 = arith.constant 0 : i32
    return %c0_i32, %c0_i32_0 : i32, i32
  }
  func.func @transform_6(%arg0: i32) -> (i32, i32) {
    %c0_i32 = arith.constant 0 : i32
    %c0_i32_0 = arith.constant 0 : i32
    %c0_i32_1 = arith.constant 0 : i32
    return %c0_i32, %c0_i32_0 : i32, i32
  }
  func.func @transform_7(%arg0: i32) -> (i32, i32) {
    %c0_i32 = arith.constant 0 : i32
    %c0_i32_0 = arith.constant 0 : i32
    %c0_i32_1 = arith.constant 0 : i32
    return %c0_i32, %c0_i32_0 : i32, i32
  }
  func.func @transform_8(%arg0: i32) -> (i32, i32) {
    %c0_i32 = arith.constant 0 : i32
    %c0_i32_0 = arith.constant 0 : i32
    return %arg0, %c0_i32 : i32, i32
  }
}

</mosaic_0001>

<llo_original>
// kernel: tpu_custom_call.1
$region0: #{tpu_custom_call.1}
  #allocation0 [shape = 'u32[]', space=smem, size = 0x4, offset = 0x4, fixed_abs, tag = 'smem constant byte address 0x4 - core index']
  #allocation1 [shape = 'u32[144,128]{1,0:T(1,128)}', space=vmem, size = 0x12000, scoped, tag = 'internal scratch']
  %s0 = inlined_call_operand.vmem [shape: f32[80,16], index: 0, kind: input, shape index: {}]
  %s1 = inlined_call_operand.vmem [shape: f32[16,32], index: 1, kind: input, shape index: {}]
  %s2 = inlined_call_operand.vmem [shape: f32[1,32], index: 2, kind: input, shape index: {}]
  %s3 = inlined_call_operand.vmem [shape: f32[32,32], index: 3, kind: input, shape index: {}]
  %s4 = inlined_call_operand.vmem [shape: f32[1,32], index: 4, kind: input, shape index: {}]
  %s5 = inlined_call_operand.vmem [shape: f32[1,32], index: 5, kind: input, shape index: {}]
  %s6 = inlined_call_operand.vmem [shape: f32[32,128], index: 6, kind: input, shape index: {}]
  %s7 = inlined_call_operand.vmem [shape: f32[1,128], index: 7, kind: input, shape index: {}]
  %s8 = inlined_call_operand.hbm [shape: f32[80,128], index: 8, kind: output, shape index: {}]
  %s9 = sld [smem:[#allocation0]]
  $region65: #{tpu_custom_call.1} parent=0
    _
  %s11 = ssub.s32 1, %s9
  %s12 = scalar_select 0, %s11, %s9
  $region1: #{tpu_custom_call.1} parent=0
    #allocation2 [shape = 'u8[40960]{0}', space=vmem, size = 0xa000, scoped, tag = 'output window, operand 0']
    #allocation3 [shape = 's32[2]{0}', space=sflag, size = 0x8, scoped, tag = 'scoped memory for tpu_custom_call.1']
    %13 = vsyncpa [#allocation3], 0
    %s14 = scalar_lea.sflag [#allocation3], 1
    %15 = vsyncpa %s14, 0
    loop: start=0, step=1, limit=4
    $region2: #{tpu_custom_call.1} parent=1 // loop_pre_header
      _
    $region3: #{tpu_custom_call.1} parent=1 // loop_header
      %s17 = sphi 0, %s21
      %p18 = scmp.ge.s32.totalorder %s17, 4
      %s27 = sphi 0, %s29
      %s30 = sphi 0, %s27
      %s31 = sphi 0, %s30
      %s47 = sphi 0, %s31
      %s51 = sphi 0, %s51
      %s53 = sphi 0, %s51
      %s54 = sphi 0, %s53
      %s68 = sphi 0, %s54
      %s72 = sphi 0, %s72
      %s74 = sphi 0, %s72
      %s75 = sphi 0, %s74
      %s89 = sphi 0, %s75
      %s93 = sphi 0, %s93
      %s95 = sphi 0, %s93
      %s96 = sphi 0, %s95
      %s110 = sphi 0, %s96
      %s114 = sphi 0, %s114
      %s116 = sphi 0, %s114
      %s117 = sphi 0, %s116
      %s131 = sphi 0, %s117
      %s135 = sphi 0, %s135
      %s137 = sphi 0, %s135
      %s138 = sphi 0, %s137
      %s152 = sphi 0, %s138
      %s156 = sphi 0, %s156
      %s158 = sphi 0, %s156
      %s159 = sphi 0, %s158
      %s173 = sphi 0, %s159
      %s177 = sphi 0, %s177
      %s179 = sphi 0, %s177
      %s180 = sphi 0, %s179
      %s194 = sphi 0, %s180
      %s200 = sphi 0, %s202
      %s203 = sphi 0, %s200
      %s204 = sphi 0, %s203
      %s220 = sphi 0, %s204
    $region4: #{tpu_custom_call.1} parent=1 // loop_header_branch
      %20 = sbr.rel (%p18) target = $region8
    $region5: #{tpu_custom_call.1} parent=1 // loop_body
      %s22 = ssub.s32 %s17, 1
      %s23 = ssub.s32 %s17, 2
      %s24 = sadd.s32 %s17, 1
      %s25 = ssub.s32 %s17, %s24
      %p26 = scmp.eq.s32.totalorder %s25, 0
      %s28 = sadd.s32 %s27, 1
      %s29 = scalar_select %p26, %s27, %s28
      %p32 = pneg %p26
      %p33 = scmp.eq.s32.totalorder %s17, 1
      %p34 = por %p32, %p33
      %p35 = scmp.ne.s32.totalorder %s27, %s30
      %p36 = scmp.eq.s32.totalorder %s17, 0
      %p37 = por %p35, %p36
      %p38 = scmp.ne.s32.totalorder %s27, %s30
      %p39 = scmp.eq.s32.totalorder %s22, 1
      %p40 = por %p38, %p39
      %p41 = scmp.ne.s32.totalorder %s30, %s31
      %p42 = scmp.eq.s32.totalorder %s22, 0
      %p43 = por %p41, %p42
      %p44 = scmp.ne.s32.totalorder %s30, %s31
      %p45 = scmp.eq.s32.totalorder %s23, 1
      %p46 = por %p44, %p45
      %p48 = scmp.ne.s32.totalorder %s31, %s47
      %p49 = scmp.eq.s32.totalorder %s23, 0
      %p50 = por %p48, %p49
      %s52 = sadd.s32 %s51, 1
      %p55 = scmp.eq.s32.totalorder %s17, 1
      %p56 = scmp.ne.s32.totalorder %s51, %s53
      %p57 = scmp.eq.s32.totalorder %s17, 0
      %p58 = por %p56, %p57
      %p59 = scmp.ne.s32.totalorder %s51, %s53
      %p60 = scmp.eq.s32.totalorder %s22, 1
      %p61 = por %p59, %p60
      %p62 = scmp.ne.s32.totalorder %s53, %s54
      %p63 = scmp.eq.s32.totalorder %s22, 0
      %p64 = por %p62, %p63
      %p65 = scmp.ne.s32.totalorder %s53, %s54
      %p66 = scmp.eq.s32.totalorder %s23, 1
      %p67 = por %p65, %p66
      %p69 = scmp.ne.s32.totalorder %s54, %s68
      %p70 = scmp.eq.s32.totalorder %s23, 0
      %p71 = por %p69, %p70
      %s73 = sadd.s32 %s72, 1
      %p76 = scmp.eq.s32.totalorder %s17, 1
      %p77 = scmp.ne.s32.totalorder %s72, %s74
      %p78 = scmp.eq.s32.totalorder %s17, 0
      %p79 = por %p77, %p78
      %p80 = scmp.ne.s32.totalorder %s72, %s74
      %p81 = scmp.eq.s32.totalorder %s22, 1
      %p82 = por %p80, %p81
      %p83 = scmp.ne.s32.totalorder %s74, %s75
      %p84 = scmp.eq.s32.totalorder %s22, 0
      %p85 = por %p83, %p84
      %p86 = scmp.ne.s32.totalorder %s74, %s75
      %p87 = scmp.eq.s32.totalorder %s23, 1
      %p88 = por %p86, %p87
      %p90 = scmp.ne.s32.totalorder %s75, %s89
      %p91 = scmp.eq.s32.totalorder %s23, 0
      %p92 = por %p90, %p91
      %s94 = sadd.s32 %s93, 1
      %p97 = scmp.eq.s32.totalorder %s17, 1
      %p98 = scmp.ne.s32.totalorder %s93, %s95
      %p99 = scmp.eq.s32.totalorder %s17, 0
      %p100 = por %p98, %p99
      %p101 = scmp.ne.s32.totalorder %s93, %s95
      %p102 = scmp.eq.s32.totalorder %s22, 1
      %p103 = por %p101, %p102
      %p104 = scmp.ne.s32.totalorder %s95, %s96
      %p105 = scmp.eq.s32.totalorder %s22, 0
      %p106 = por %p104, %p105
      %p107 = scmp.ne.s32.totalorder %s95, %s96
      %p108 = scmp.eq.s32.totalorder %s23, 1
      %p109 = por %p107, %p108
      %p111 = scmp.ne.s32.totalorder %s96, %s110
      %p112 = scmp.eq.s32.totalorder %s23, 0
      %p113 = por %p111, %p112
      %s115 = sadd.s32 %s114, 1
      %p118 = scmp.eq.s32.totalorder %s17, 1
      %p119 = scmp.ne.s32.totalorder %s114, %s116
      %p120 = scmp.eq.s32.totalorder %s17, 0
      %p121 = por %p119, %p120
      %p122 = scmp.ne.s32.totalorder %s114, %s116
      %p123 = scmp.eq.s32.totalorder %s22, 1
      %p124 = por %p122, %p123
      %p125 = scmp.ne.s32.totalorder %s116, %s117
      %p126 = scmp.eq.s32.totalorder %s22, 0
      %p127 = por %p125, %p126
      %p128 = scmp.ne.s32.totalorder %s116, %s117
      %p129 = scmp.eq.s32.totalorder %s23, 1
      %p130 = por %p128, %p129
      %p132 = scmp.ne.s32.totalorder %s117, %s131
      %p133 = scmp.eq.s32.totalorder %s23, 0
      %p134 = por %p132, %p133
      %s136 = sadd.s32 %s135, 1
      %p139 = scmp.eq.s32.totalorder %s17, 1
      %p140 = scmp.ne.s32.totalorder %s135, %s137
      %p141 = scmp.eq.s32.totalorder %s17, 0
      %p142 = por %p140, %p141
      %p143 = scmp.ne.s32.totalorder %s135, %s137
      %p144 = scmp.eq.s32.totalorder %s22, 1
      %p145 = por %p143, %p144
      %p146 = scmp.ne.s32.totalorder %s137, %s138
      %p147 = scmp.eq.s32.totalorder %s22, 0
      %p148 = por %p146, %p147
      %p149 = scmp.ne.s32.totalorder %s137, %s138
      %p150 = scmp.eq.s32.totalorder %s23, 1
      %p151 = por %p149, %p150
      %p153 = scmp.ne.s32.totalorder %s138, %s152
      %p154 = scmp.eq.s32.totalorder %s23, 0
      %p155 = por %p153, %p154
      %s157 = sadd.s32 %s156, 1
      %p160 = scmp.eq.s32.totalorder %s17, 1
      %p161 = scmp.ne.s32.totalorder %s156, %s158
      %p162 = scmp.eq.s32.totalorder %s17, 0
      %p163 = por %p161, %p162
      %p164 = scmp.ne.s32.totalorder %s156, %s158
      %p165 = scmp.eq.s32.totalorder %s22, 1
      %p166 = por %p164, %p165
      %p167 = scmp.ne.s32.totalorder %s158, %s159
      %p168 = scmp.eq.s32.totalorder %s22, 0
      %p169 = por %p167, %p168
      %p170 = scmp.ne.s32.totalorder %s158, %s159
      %p171 = scmp.eq.s32.totalorder %s23, 1
      %p172 = por %p170, %p171
      %p174 = scmp.ne.s32.totalorder %s159, %s173
      %p175 = scmp.eq.s32.totalorder %s23, 0
      %p176 = por %p174, %p175
      %s178 = sadd.s32 %s177, 1
      %p181 = scmp.eq.s32.totalorder %s17, 1
      %p182 = scmp.ne.s32.totalorder %s177, %s179
      %p183 = scmp.eq.s32.totalorder %s17, 0
      %p184 = por %p182, %p183
      %p185 = scmp.ne.s32.totalorder %s177, %s179
      %p186 = scmp.eq.s32.totalorder %s22, 1
      %p187 = por %p185, %p186
      %p188 = scmp.ne.s32.totalorder %s179, %s180
      %p189 = scmp.eq.s32.totalorder %s22, 0
      %p190 = por %p188, %p189
      %p191 = scmp.ne.s32.totalorder %s179, %s180
      %p192 = scmp.eq.s32.totalorder %s23, 1
      %p193 = por %p191, %p192
      %p195 = scmp.ne.s32.totalorder %s180, %s194
      %p196 = scmp.eq.s32.totalorder %s23, 0
      %p197 = por %p195, %p196
      %s198 = ssub.s32 %s17, %s24
      %p199 = scmp.eq.s32.totalorder %s198, 0
      %s201 = sadd.s32 %s200, 1
      %s202 = scalar_select %p199, %s200, %s201
      %p205 = pneg %p199
      %p206 = scmp.eq.s32.totalorder %s17, 1
      %p207 = por %p205, %p206
      %p208 = scmp.ne.s32.totalorder %s200, %s203
      %p209 = scmp.eq.s32.totalorder %s17, 0
      %p210 = por %p208, %p209
      %p211 = scmp.ne.s32.totalorder %s200, %s203
      %p212 = scmp.eq.s32.totalorder %s22, 1
      %p213 = por %p211, %p212
      %p214 = scmp.ne.s32.totalorder %s203, %s204
      %p215 = scmp.eq.s32.totalorder %s22, 0
      %p216 = por %p214, %p215
      %p217 = scmp.ne.s32.totalorder %s203, %s204
      %p218 = scmp.eq.s32.totalorder %s23, 1
      %p219 = por %p217, %p218
      %p221 = scmp.ne.s32.totalorder %s204, %s220
      %p222 = scmp.eq.s32.totalorder %s23, 0
      %p223 = por %p221, %p222
      %p224 = scmp.le.s32.totalorder 1, %s17
      %p225 = scmp.lt.s32.totalorder %s17, 3
      %p226 = pnand %p224, %p225
      %p227 = pneg %p226
      // Predicated region
      $region9: #{tpu_custom_call.1} parent=5 // pred_check
        _
      $region10: #{tpu_custom_call.1} parent=5 // pred_check_branch
        %229 = sbr.rel (%p226) target = $region12
      $region11: #{tpu_custom_call.1} parent=5 // pred_region
        %s230 = ssub.s32 %s17, 1
        // Predicated region
        $region13: #{tpu_custom_call.1} parent=11 // pred_check
          %p231 = pneg %p64
        $region14: #{tpu_custom_call.1} parent=11 // pred_check_branch
          %233 = sbr.rel (%p231) target = $region16
        $region15: #{tpu_custom_call.1} parent=11 // pred_region
          _
        $region16: #{tpu_custom_call.1} parent=11 // pred_fallthru
          _
        // Predicated region
        $region17: #{tpu_custom_call.1} parent=11 // pred_check
          %p234 = pneg %p85
        $region18: #{tpu_custom_call.1} parent=11 // pred_check_branch
          %236 = sbr.rel (%p234) target = $region20
        $region19: #{tpu_custom_call.1} parent=11 // pred_region
          _
        $region20: #{tpu_custom_call.1} parent=11 // pred_fallthru
          _
        // Predicated region
        $region21: #{tpu_custom_call.1} parent=11 // pred_check
          %p237 = pneg %p106
        $region22: #{tpu_custom_call.1} parent=11 // pred_check_branch
          %239 = sbr.rel (%p237) target = $region24
        $region23: #{tpu_custom_call.1} parent=11 // pred_region
          _
        $region24: #{tpu_custom_call.1} parent=11 // pred_fallthru
          _
        // Predicated region
        $region25: #{tpu_custom_call.1} parent=11 // pred_check
          %p240 = pneg %p127
        $region26: #{tpu_custom_call.1} parent=11 // pred_check_branch
          %242 = sbr.rel (%p240) target = $region28
        $region27: #{tpu_custom_call.1} parent=11 // pred_region
          _
        $region28: #{tpu_custom_call.1} parent=11 // pred_fallthru
          _
        // Predicated region
        $region29: #{tpu_custom_call.1} parent=11 // pred_check
          %p243 = pneg %p148
        $region30: #{tpu_custom_call.1} parent=11 // pred_check_branch
          %245 = sbr.rel (%p243) target = $region32
        $region31: #{tpu_custom_call.1} parent=11 // pred_region
          _
        $region32: #{tpu_custom_call.1} parent=11 // pred_fallthru
          _
        // Predicated region
        $region33: #{tpu_custom_call.1} parent=11 // pred_check
          %p246 = pneg %p169
        $region34: #{tpu_custom_call.1} parent=11 // pred_check_branch
          %248 = sbr.rel (%p246) target = $region36
        $region35: #{tpu_custom_call.1} parent=11 // pred_region
          _
        $region36: #{tpu_custom_call.1} parent=11 // pred_fallthru
          _
        // Predicated region
        $region37: #{tpu_custom_call.1} parent=11 // pred_check
          %p249 = pneg %p190
        $region38: #{tpu_custom_call.1} parent=11 // pred_check_branch
          %251 = sbr.rel (%p249) target = $region40
        $region39: #{tpu_custom_call.1} parent=11 // pred_region
          _
        $region40: #{tpu_custom_call.1} parent=11 // pred_fallthru
          _
      $region12: #{tpu_custom_call.1} parent=5 // pred_fallthru
        _
      %p252 = scmp.lt.s32.totalorder %s17, 2
      // Predicated region
      $region41: #{tpu_custom_call.1} parent=5 // pred_check
        %p253 = pneg %p252
      $region42: #{tpu_custom_call.1} parent=5 // pred_check_branch
        %255 = sbr.rel (%p253) target = $region44
      $region43: #{tpu_custom_call.1} parent=5 // pred_region
        // Predicated region
        $region45: #{tpu_custom_call.1} parent=43 // pred_check
          %p256 = pneg %p37
        $region46: #{tpu_custom_call.1} parent=43 // pred_check_branch
          %258 = sbr.rel (%p256) target = $region48
        $region47: #{tpu_custom_call.1} parent=43 // pred_region
          %s259 = smul.u32 5, %s17
          %p260 = scmp.lt.s32.totalorder %s259, 9
          %s261 = scalar_select %p260, %s259, 9
          %s262 = smul.addr %s261, 8
          %s263 = scalar_lea.vmem %s0, %s262
          %s264 = smul.u32 5, %s17
        $region48: #{tpu_custom_call.1} parent=43 // pred_fallthru
          _
      $region44: #{tpu_custom_call.1} parent=5 // pred_fallthru
        _
      %p265 = scmp.le.s32.totalorder 1, %s17
      %p266 = scmp.lt.s32.totalorder %s17, 3
      %p267 = pnand %p265, %p266
      %p268 = pneg %p267
      // Predicated region
      $region49: #{tpu_custom_call.1} parent=5 // pred_check
        _
      $region50: #{tpu_custom_call.1} parent=5 // pred_check_branch
        %270 = sbr.rel (%p267) target = $region52
      $region51: #{tpu_custom_call.1} parent=5 // pred_region
        %s271 = ssub.s32 %s17, 1
        %s272 = smul.u32 5, %s22
        %p273 = scmp.lt.s32.totalorder %s272, 9
        %s274 = scalar_select %p273, %s272, 9
        %s275 = smul.addr %s274, 8
        %s276 = scalar_lea.vmem %s0, %s275
        %p277 = pneg %p43
        %p278 = pneg %p40
        %p279 = pneg %p64
        %p280 = pneg %p61
        %p281 = pneg %p85
        %p282 = pneg %p82
        %p283 = pneg %p106
        %p284 = pneg %p103
        %p285 = pneg %p127
        %p286 = pneg %p124
        %p287 = pneg %p148
        %p288 = pneg %p145
        %p289 = pneg %p169
        %p290 = pneg %p166
        %p291 = pneg %p190
        %p292 = pneg %p187
        %p293 = pneg %p216
        %p294 = pneg %p213
        %s295 = sand.u32 %s203, 1
        %s296 = scalar_lea.sflag [#allocation3], %s295
        %s297 = sand.u32 %s203, 1
        %s298 = smul.addr %s297, 40
        %s299 = scalar_lea.vmem [#allocation2], %s298
        %s300 = smul.u32 5, %s22
        %p301 = scmp.lt.s32.totalorder %s300, 9
        %s302 = scalar_select %p301, %s300, 9
        %s303 = smul.addr %s302, 8
        %s304 = scalar_lea.vmem %s0, %s303
        %s305 = smul.u32 5, %s22
        %s306 = smul.u32 5, %s22
        %v307 = vld [vmem:[%s2] sm:$0x1]
        %v308 = vld [vmem:[%s4] sm:$0x1]
        %v309 = vld [vmem:[%s5] sm:$0x1]
        %v310 = vld [vmem:[%s7] sm:$0x1]
        %v311 = vld [vmem:[%s304] sm:$0xff]
        %v312 = vld [vmem:[%s304 + $0x8] sm:$0xff]
        %v313 = vld [vmem:[%s304 + $0x10] sm:$0xff]
        %v314 = vld [vmem:[%s304 + $0x18] sm:$0xff]
        %v315 = vld [vmem:[%s304 + $0x20] sm:$0xff]
        %v316 = vld [vmem:[%s1] sm:$0xff]
        %v317 = vld [vmem:[%s1 + $0x8] sm:$0xff]
        %v319 = vlaneseq
        %v320 = vshrl.u32 %v319, 7
        %v321 = vsub.s32 0, %v320
        %v322 = vrot.slane %v307, %v321
        %vm324 = vcmask 130048
        %v326 = vsel %vm324, %v311, 0
        %v329 = vsel %vm324, %v312, 0
        %v332 = vsel %vm324, %v313, 0
        %v335 = vsel %vm324, %v314, 0
        %v338 = vsel %vm324, %v315, 0
        %340 = vmatprep.subr.mxu0 0.0
        %341 = vmatpush1.msra.mxu0 %v316
        %342 = vmatprep.subr.mxu0 0.0
        %343 = vmatpush1.msra.mxu0 %v317
        %344 = vmatprep.subr.mxu0 0.0
        %345 = vmatpush1.msra.mxu0 0.0
        %346 = vmatprep.subr.mxu0 0.0
        %347 = vmatpush1.msra.mxu0 0.0
        %348 = vmatprep.subr.mxu0 0.0
        %349 = vmatpush1.msra.mxu0 0.0
        %350 = vmatprep.subr.mxu0 0.0
        %351 = vmatpush1.msra.mxu0 0.0
        %352 = vmatprep.subr.mxu0 0.0
        %353 = vmatpush1.msra.mxu0 0.0
        %354 = vmatprep.subr.mxu0 0.0
        %355 = vmatpush1.msra.mxu0 0.0
        %356 = vmatprep.subr.mxu0 0.0
        %357 = vmatpush1.msra.mxu0 0.0
        %358 = vmatprep.subr.mxu0 0.0
        %359 = vmatpush1.msra.mxu0 0.0
        %360 = vmatprep.subr.mxu0 0.0
        %361 = vmatpush1.msra.mxu0 0.0
        %362 = vmatprep.subr.mxu0 0.0
        %363 = vmatpush1.msra.mxu0 0.0
        %364 = vmatprep.subr.mxu0 0.0
        %365 = vmatpush1.msra.mxu0 0.0
        %366 = vmatprep.subr.mxu0 0.0
        %367 = vmatpush1.msra.mxu0 0.0
        %368 = vmatprep.subr.mxu0 0.0
        %369 = vmatpush1.msra.mxu0 0.0
        %370 = vmatprep.subr.mxu0 0.0
        %371 = vmatpush1.msra.mxu0 0.0
        %372 = vmatprep.subr.mxu0 0.0
        %373 = vmatpush1.msra.mxu0 0.0
        %374 = vmatprep.subr.mxu0 0.0
        %375 = vmatpush1.msra.mxu0 0.0
        %376 = vmatprep.subr.mxu0 0.0
        %377 = vmatpush1.msra.mxu0 0.0
        %378 = vmatprep.subr.mxu0 0.0
        %379 = vmatpush1.msra.mxu0 0.0
        %380 = vmatprep.subr.mxu0 0.0
        %381 = vmatpush1.msra.mxu0 0.0
        %382 = vmatprep.subr.mxu0 0.0
        %383 = vmatpush1.msra.mxu0 0.0
        %384 = vmatprep.subr.mxu0 0.0
        %385 = vmatpush1.msra.mxu0 0.0
        %386 = vmatprep.subr.mxu0 0.0
        %387 = vmatpush1.msra.mxu0 0.0
        %388 = vmatprep.subr.mxu0 0.0
        %389 = vmatpush1.msra.mxu0 0.0
        %390 = vmatprep.subr.mxu0 0.0
        %391 = vmatpush1.msra.mxu0 0.0
        %392 = vmatprep.subr.mxu0 0.0
        %393 = vmatpush1.msra.mxu0 0.0
        %394 = vmatprep.subr.mxu0 0.0
        %395 = vmatpush1.msra.mxu0 0.0
        %396 = vmatprep.subr.mxu0 0.0
        %397 = vmatpush1.msra.mxu0 0.0
        %398 = vmatprep.subr.mxu0 0.0
        %399 = vmatpush1.msra.mxu0 0.0
        %400 = vmatprep.subr.mxu0 0.0
        %401 = vmatpush1.msra.mxu0 0.0
        %402 = vmatprep.subr.mxu0 0.0
        %403 = vmatpush1.msra.mxu0 0.0
        %404 = vmatprep.mubr.f32.mxu0 0.0
        %405 = vmatmul.mubr.f32.gmra.mrb[0].mxu0 %v326
        %v406 = vpop.f32.mrb[0].mxu0
        %v407 = vadd.f32 %v322, %v406
        %v408 = vpop.f32.mrb[0].mxu0
        %409 = vmatprep.mubr.f32.mxu0 0.0
        %410 = vmatmul.mubr.f32.gmra.mrb[0].mxu0 %v329
        %v411 = vpop.f32.mrb[0].mxu0
        %v412 = vadd.f32 %v322, %v411
        %v413 = vpop.f32.mrb[0].mxu0
        %414 = vmatprep.mubr.f32.mxu0 0.0
        %415 = vmatmul.mubr.f32.gmra.mrb[0].mxu0 %v332
        %v416 = vpop.f32.mrb[0].mxu0
        %v417 = vadd.f32 %v322, %v416
        %v418 = vpop.f32.mrb[0].mxu0
        %419 = vmatprep.mubr.f32.mxu0 0.0
        %420 = vmatmul.mubr.f32.gmra.mrb[0].mxu0 %v335
        %v421 = vpop.f32.mrb[0].mxu0
        %v422 = vadd.f32 %v322, %v421
        %v423 = vpop.f32.mrb[0].mxu0
        %424 = vmatprep.mubr.f32.mxu0 0.0
        %425 = vmatmul.mubr.f32.gmra.mrb[0].mxu0 %v338
        %v426 = vpop.f32.mrb[0].mxu0
        %v427 = vadd.f32 %v322, %v426
        %v428 = vpop.f32.mrb[0].mxu0
        %429 = vdwg.mxu0
        %vm430 = vcmp.ge.f32.partialorder %v407, 0.0
        %vm431 = vcmp.ge.f32.partialorder %v412, 0.0
        %vm432 = vcmp.ge.f32.partialorder %v417, 0.0
        %vm433 = vcmp.ge.f32.partialorder %v422, 0.0
        %vm434 = vcmp.ge.f32.partialorder %v427, 0.0
        %v435 = vmul.f32 %v407, 0.01
        %v436 = vmul.f32 %v412, 0.01
        %v437 = vmul.f32 %v417, 0.01
        %v438 = vmul.f32 %v422, 0.01
        %v439 = vmul.f32 %v427, 0.01
        %v440 = vsel %vm430, %v407, %v435
        %v441 = vsel %vm431, %v412, %v436
        %v442 = vsel %vm432, %v417, %v437
        %v443 = vsel %vm433, %v422, %v438
        %v444 = vsel %vm434, %v427, %v439
        %v445 = vld [vmem:[%s3] sm:$0xff]
        %v446 = vld [vmem:[%s3 + $0x8] sm:$0xff]
        %v447 = vld [vmem:[%s3 + $0x10] sm:$0xff]
        %v448 = vld [vmem:[%s3 + $0x18] sm:$0xff]
        %v450 = vlaneseq
        %v451 = vshrl.u32 %v450, 7
        %v452 = vsub.s32 0, %v451
        %v453 = vrot.slane %v308, %v452
        %vm455 = vcmask 261120
        %v457 = vsel %vm455, %v440, 0
        %v460 = vsel %vm455, %v441, 0
        %v463 = vsel %vm455, %v442, 0
        %v466 = vsel %vm455, %v443, 0
        %v469 = vsel %vm455, %v444, 0
        %471 = vmatprep.subr.mxu0 0.0
        %472 = vmatpush1.msra.mxu0 %v445
        %473 = vmatprep.subr.mxu0 0.0
        %474 = vmatpush1.msra.mxu0 %v446
        %475 = vmatprep.subr.mxu0 0.0
        %476 = vmatpush1.msra.mxu0 %v447
        %477 = vmatprep.subr.mxu0 0.0
        %478 = vmatpush1.msra.mxu0 %v448
        %479 = vmatprep.subr.mxu0 0.0
        %480 = vmatpush1.msra.mxu0 0.0
        %481 = vmatprep.subr.mxu0 0.0
        %482 = vmatpush1.msra.mxu0 0.0
        %483 = vmatprep.subr.mxu0 0.0
        %484 = vmatpush1.msra.mxu0 0.0
        %485 = vmatprep.subr.mxu0 0.0
        %486 = vmatpush1.msra.mxu0 0.0
        %487 = vmatprep.subr.mxu0 0.0
        %488 = vmatpush1.msra.mxu0 0.0
        %489 = vmatprep.subr.mxu0 0.0
        %490 = vmatpush1.msra.mxu0 0.0
        %491 = vmatprep.subr.mxu0 0.0
        %492 = vmatpush1.msra.mxu0 0.0
        %493 = vmatprep.subr.mxu0 0.0
        %494 = vmatpush1.msra.mxu0 0.0
        %495 = vmatprep.subr.mxu0 0.0
        %496 = vmatpush1.msra.mxu0 0.0
        %497 = vmatprep.subr.mxu0 0.0
        %498 = vmatpush1.msra.mxu0 0.0
        %499 = vmatprep.subr.mxu0 0.0
        %500 = vmatpush1.msra.mxu0 0.0
        %501 = vmatprep.subr.mxu0 0.0
        %502 = vmatpush1.msra.mxu0 0.0
        %503 = vmatprep.subr.mxu0 0.0
        %504 = vmatpush1.msra.mxu0 0.0
        %505 = vmatprep.subr.mxu0 0.0
        %506 = vmatpush1.msra.mxu0 0.0
        %507 = vmatprep.subr.mxu0 0.0
        %508 = vmatpush1.msra.mxu0 0.0
        %509 = vmatprep.subr.mxu0 0.0
        %510 = vmatpush1.msra.mxu0 0.0
        %511 = vmatprep.subr.mxu0 0.0
        %512 = vmatpush1.msra.mxu0 0.0
        %513 = vmatprep.subr.mxu0 0.0
        %514 = vmatpush1.msra.mxu0 0.0
        %515 = vmatprep.subr.mxu0 0.0
        %516 = vmatpush1.msra.mxu0 0.0
        %517 = vmatprep.subr.mxu0 0.0
        %518 = vmatpush1.msra.mxu0 0.0
        %519 = vmatprep.subr.mxu0 0.0
        %520 = vmatpush1.msra.mxu0 0.0
        %521 = vmatprep.subr.mxu0 0.0
        %522 = vmatpush1.msra.mxu0 0.0
        %523 = vmatprep.subr.mxu0 0.0
        %524 = vmatpush1.msra.mxu0 0.0
        %525 = vmatprep.subr.mxu0 0.0
        %526 = vmatpush1.msra.mxu0 0.0
        %527 = vmatprep.subr.mxu0 0.0
        %528 = vmatpush1.msra.mxu0 0.0
        %529 = vmatprep.subr.mxu0 0.0
        %530 = vmatpush1.msra.mxu0 0.0
        %531 = vmatprep.subr.mxu0 0.0
        %532 = vmatpush1.msra.mxu0 0.0
        %533 = vmatprep.subr.mxu0 0.0
        %534 = vmatpush1.msra.mxu0 0.0
        %535 = vmatprep.mubr.f32.mxu0 0.0
        %536 = vmatmul.mubr.f32.gmra.mrb[0].mxu0 %v457
        %v537 = vpop.f32.mrb[0].mxu0
        %v538 = vadd.f32 %v453, %v537
        %v539 = vpop.f32.mrb[0].mxu0
        %540 = vmatprep.mubr.f32.mxu0 0.0
        %541 = vmatmul.mubr.f32.gmra.mrb[0].mxu0 %v460
        %v542 = vpop.f32.mrb[0].mxu0
        %v543 = vadd.f32 %v453, %v542
        %v544 = vpop.f32.mrb[0].mxu0
        %545 = vmatprep.mubr.f32.mxu0 0.0
        %546 = vmatmul.mubr.f32.gmra.mrb[0].mxu0 %v463
        %v547 = vpop.f32.mrb[0].mxu0
        %v548 = vadd.f32 %v453, %v547
        %v549 = vpop.f32.mrb[0].mxu0
        %550 = vmatprep.mubr.f32.mxu0 0.0
        %551 = vmatmul.mubr.f32.gmra.mrb[0].mxu0 %v466
        %v552 = vpop.f32.mrb[0].mxu0
        %v553 = vadd.f32 %v453, %v552
        %v554 = vpop.f32.mrb[0].mxu0
        %555 = vmatprep.mubr.f32.mxu0 0.0
        %556 = vmatmul.mubr.f32.gmra.mrb[0].mxu0 %v469
        %v557 = vpop.f32.mrb[0].mxu0
        %v558 = vadd.f32 %v453, %v557
        %v559 = vpop.f32.mrb[0].mxu0
        %560 = vdwg.mxu0
        %vm561 = vcmp.ge.f32.partialorder %v538, 0.0
        %vm562 = vcmp.ge.f32.partialorder %v543, 0.0
        %vm563 = vcmp.ge.f32.partialorder %v548, 0.0
        %vm564 = vcmp.ge.f32.partialorder %v553, 0.0
        %vm565 = vcmp.ge.f32.partialorder %v558, 0.0
        %v567 = vlaneseq
        %v568 = vshrl.u32 %v567, 7
        %v569 = vsub.s32 0, %v568
        %v570 = vrot.slane %v309, %v569
        %v572 = vmul.f32 %v570, %v538
        %v573 = vmul.f32 %v570, %v543
        %v574 = vmul.f32 %v570, %v548
        %v575 = vmul.f32 %v570, %v553
        %v576 = vmul.f32 %v570, %v558
        %v577 = vsel %vm561, %v538, %v572
        %v578 = vsel %vm562, %v543, %v573
        %v579 = vsel %vm563, %v548, %v574
        %v580 = vsel %vm564, %v553, %v575
        %v581 = vsel %vm565, %v558, %v576
        %v582 = vld [vmem:[%s6] sm:$0xff]
        %v583 = vld [vmem:[%s6 + $0x8] sm:$0xff]
        %v584 = vld [vmem:[%s6 + $0x10] sm:$0xff]
        %v585 = vld [vmem:[%s6 + $0x18] sm:$0xff]
        %v587 = vlaneseq
        %v588 = vshrl.u32 %v587, 7
        %v589 = vsub.s32 0, %v588
        %v590 = vrot.slane %v310, %v589
        %v593 = vsel %vm455, %v577, 0
        %v596 = vsel %vm455, %v578, 0
        %v599 = vsel %vm455, %v579, 0
        %v602 = vsel %vm455, %v580, 0
        %v605 = vsel %vm455, %v581, 0
        %607 = vmatprep.subr.mxu0 0.0
        %608 = vmatpush1.msra.mxu0 %v582
        %609 = vmatprep.subr.mxu0 0.0
        %610 = vmatpush1.msra.mxu0 %v583
        %611 = vmatprep.subr.mxu0 0.0
        %612 = vmatpush1.msra.mxu0 %v584
        %613 = vmatprep.subr.mxu0 0.0
        %614 = vmatpush1.msra.mxu0 %v585
        %615 = vmatprep.subr.mxu0 0.0
        %616 = vmatpush1.msra.mxu0 0.0
        %617 = vmatprep.subr.mxu0 0.0
        %618 = vmatpush1.msra.mxu0 0.0
        %619 = vmatprep.subr.mxu0 0.0
        %620 = vmatpush1.msra.mxu0 0.0
        %621 = vmatprep.subr.mxu0 0.0
        %622 = vmatpush1.msra.mxu0 0.0
        %623 = vmatprep.subr.mxu0 0.0
        %624 = vmatpush1.msra.mxu0 0.0
        %625 = vmatprep.subr.mxu0 0.0
        %626 = vmatpush1.msra.mxu0 0.0
        %627 = vmatprep.subr.mxu0 0.0
        %628 = vmatpush1.msra.mxu0 0.0
        %629 = vmatprep.subr.mxu0 0.0
        %630 = vmatpush1.msra.mxu0 0.0
        %631 = vmatprep.subr.mxu0 0.0
        %632 = vmatpush1.msra.mxu0 0.0
        %633 = vmatprep.subr.mxu0 0.0
        %634 = vmatpush1.msra.mxu0 0.0
        %635 = vmatprep.subr.mxu0 0.0
        %636 = vmatpush1.msra.mxu0 0.0
        %637 = vmatprep.subr.mxu0 0.0
        %638 = vmatpush1.msra.mxu0 0.0
        %639 = vmatprep.subr.mxu0 0.0
        %640 = vmatpush1.msra.mxu0 0.0
        %641 = vmatprep.subr.mxu0 0.0
        %642 = vmatpush1.msra.mxu0 0.0
        %643 = vmatprep.subr.mxu0 0.0
        %644 = vmatpush1.msra.mxu0 0.0
        %645 = vmatprep.subr.mxu0 0.0
        %646 = vmatpush1.msra.mxu0 0.0
        %647 = vmatprep.subr.mxu0 0.0
        %648 = vmatpush1.msra.mxu0 0.0
        %649 = vmatprep.subr.mxu0 0.0
        %650 = vmatpush1.msra.mxu0 0.0
        %651 = vmatprep.subr.mxu0 0.0
        %652 = vmatpush1.msra.mxu0 0.0
        %653 = vmatprep.subr.mxu0 0.0
        %654 = vmatpush1.msra.mxu0 0.0
        %655 = vmatprep.subr.mxu0 0.0
        %656 = vmatpush1.msra.mxu0 0.0
        %657 = vmatprep.subr.mxu0 0.0
        %658 = vmatpush1.msra.mxu0 0.0
        %659 = vmatprep.subr.mxu0 0.0
        %660 = vmatpush1.msra.mxu0 0.0
        %661 = vmatprep.subr.mxu0 0.0
        %662 = vmatpush1.msra.mxu0 0.0
        %663 = vmatprep.subr.mxu0 0.0
        %664 = vmatpush1.msra.mxu0 0.0
        %665 = vmatprep.subr.mxu0 0.0
        %666 = vmatpush1.msra.mxu0 0.0
        %667 = vmatprep.subr.mxu0 0.0
        %668 = vmatpush1.msra.mxu0 0.0
        %669 = vmatprep.subr.mxu0 0.0
        %670 = vmatpush1.msra.mxu0 0.0
        %671 = vmatprep.mubr.f32.mxu0 0.0
        %672 = vmatmul.mubr.f32.gmra.mrb[0].mxu0 %v593
        %v673 = vpop.f32.mrb[0].mxu0
        %v674 = vadd.f32 %v590, %v673
        %v675 = vpop.f32.mrb[0].mxu0
        %676 = vmatprep.mubr.f32.mxu0 0.0
        %677 = vmatmul.mubr.f32.gmra.mrb[0].mxu0 %v596
        %v678 = vpop.f32.mrb[0].mxu0
        %v679 = vadd.f32 %v590, %v678
        %v680 = vpop.f32.mrb[0].mxu0
        %681 = vmatprep.mubr.f32.mxu0 0.0
        %682 = vmatmul.mubr.f32.gmra.mrb[0].mxu0 %v599
        %v683 = vpop.f32.mrb[0].mxu0
        %v684 = vadd.f32 %v590, %v683
        %v685 = vpop.f32.mrb[0].mxu0
        %686 = vmatprep.mubr.f32.mxu0 0.0
        %687 = vmatmul.mubr.f32.gmra.mrb[0].mxu0 %v602
        %v688 = vpop.f32.mrb[0].mxu0
        %v689 = vadd.f32 %v590, %v688
        %v690 = vpop.f32.mrb[0].mxu0
        %691 = vmatprep.mubr.f32.mxu0 0.0
        %692 = vmatmul.mubr.f32.gmra.mrb[0].mxu0 %v605
        %v693 = vpop.f32.mrb[0].mxu0
        %v694 = vadd.f32 %v590, %v693
        %v695 = vpop.f32.mrb[0].mxu0
        %696 = vdwg.mxu0
        %697 = vst [vmem:[%s299] sm:$0xff] %v674
        %698 = vst [vmem:[%s299 + $0x8] sm:$0xff] %v679
        %699 = vst [vmem:[%s299 + $0x10] sm:$0xff] %v684
        %700 = vst [vmem:[%s299 + $0x18] sm:$0xff] %v689
        %701 = vst [vmem:[%s299 + $0x20] sm:$0xff] %v694
        %s702 = sand.u32 %s203, 1
        %s703 = scalar_lea.sflag [#allocation3], %s702
        %s704 = sand.u32 %s203, 1
        %s705 = smul.addr %s704, 40
        %s706 = scalar_lea.vmem [#allocation2], %s705
        // Predicated region
        $region53: #{tpu_custom_call.1} parent=51 // pred_check
          %p707 = pneg %p213
        $region54: #{tpu_custom_call.1} parent=51 // pred_check_branch
          %709 = sbr.rel (%p707) target = $region56
        $region55: #{tpu_custom_call.1} parent=51 // pred_region
          %s710 = smul.u32 5, %s22
          %s712 = ssub.s32 640, 640
          %713 = vsyncadd %s703, %s712
          %s714 = smul.addr %s710, 128
          %s715 = scalar_lea.hbm %s8, %s714
          %s716 = sshll.u32 %s706, 4
          %s717 = int_to_ptr.vmem [resolvable:$true] %s716
          %722 = dma.vmem_to_hbm [thread:$0]  %s717, 640, %s715, %s703, 128, 128, 8
        $region56: #{tpu_custom_call.1} parent=51 // pred_fallthru
          _
      $region52: #{tpu_custom_call.1} parent=5 // pred_fallthru
        _
      %p723 = scmp.le.s32.totalorder 2, %s17
      // Predicated region
      $region57: #{tpu_custom_call.1} parent=5 // pred_check
        %p724 = pneg %p723
      $region58: #{tpu_custom_call.1} parent=5 // pred_check_branch
        %726 = sbr.rel (%p724) target = $region60
      $region59: #{tpu_custom_call.1} parent=5 // pred_region
        %s727 = ssub.s32 %s17, 2
        // Predicated region
        $region61: #{tpu_custom_call.1} parent=59 // pred_check
          %p728 = pneg %p219
        $region62: #{tpu_custom_call.1} parent=59 // pred_check_branch
          %730 = sbr.rel (%p728) target = $region64
        $region63: #{tpu_custom_call.1} parent=59 // pred_region
          %s731 = sand.u32 %s204, 1
          %s732 = scalar_lea.sflag [#allocation3], %s731
          %s733 = sand.u32 %s204, 1
          %s734 = smul.addr %s733, 40
          %s735 = scalar_lea.vmem [#allocation2], %s734
          %736 = dma.done %s732, 640
        $region64: #{tpu_custom_call.1} parent=59 // pred_fallthru
          _
      $region60: #{tpu_custom_call.1} parent=5 // pred_fallthru
        _
    $region6: #{tpu_custom_call.1} parent=1 // loop_footer
      %s21 = sadd.s32 1, %s17
    $region7: #{tpu_custom_call.1} parent=1 // loop_footer_branch
      %16 = sbr.rel target = $region3
    $region8: #{tpu_custom_call.1} parent=1 // loop_exit
      _
    %737 = vsyncpa [#allocation3], 1
    %s738 = scalar_lea.sflag [#allocation3], 1
    %739 = vsyncpa %s738, 1

// kernel: tpu_custom_call.1
$region0: #{tpu_custom_call.1}
  #allocation0 [shape = 'u32[]', space=smem, size = 0x4, offset = 0x4, fixed_abs, tag = 'smem constant byte address 0x4 - core index']
  #allocation1 [shape = 'u32[144,128]{1,0:T(1,128)}', space=vmem, size = 0x12000, scoped, tag = 'internal scratch']
  %s0 = inlined_call_operand.vmem [shape: f32[80,16], index: 0, kind: input, shape index: {}]
  %s1 = inlined_call_operand.vmem [shape: f32[16,32], index: 1, kind: input, shape index: {}]
  %s2 = inlined_call_operand.vmem [shape: f32[1,32], index: 2, kind: input, shape index: {}]
  %s3 = inlined_call_operand.vmem [shape: f32[32,32], index: 3, kind: input, shape index: {}]
  %s4 = inlined_call_operand.vmem [shape: f32[1,32], index: 4, kind: input, shape index: {}]
  %s5 = inlined_call_operand.vmem [shape: f32[1,32], index: 5, kind: input, shape index: {}]
  %s6 = inlined_call_operand.vmem [shape: f32[32,128], index: 6, kind: input, shape index: {}]
  %s7 = inlined_call_operand.vmem [shape: f32[1,128], index: 7, kind: input, shape index: {}]
  %s8 = inlined_call_operand.hbm [shape: f32[80,128], index: 8, kind: output, shape index: {}]
  %s9 = sld [smem:[#allocation0]]
  $region65: #{tpu_custom_call.1} parent=0
    _
  %s11 = ssub.s32 1, %s9
  %s12 = scalar_select 0, %s11, %s9
  $region1: #{tpu_custom_call.1} parent=0
    #allocation2 [shape = 'u8[40960]{0}', space=vmem, size = 0xa000, scoped, tag = 'output window, operand 0']
    #allocation3 [shape = 's32[2]{0}', space=sflag, size = 0x8, scoped, tag = 'scoped memory for tpu_custom_call.1']
    %13 = vsyncpa [#allocation3], 0
    %s14 = scalar_lea.sflag [#allocation3], 1
    %15 = vsyncpa %s14, 0
    loop: start=0, step=1, limit=4
    $region2: #{tpu_custom_call.1} parent=1 // loop_pre_header
      _
    $region3: #{tpu_custom_call.1} parent=1 // loop_header
      %s17 = sphi 0, %s21
      %p18 = scmp.ge.s32.totalorder %s17, 4
      %s27 = sphi 0, %s29
      %s30 = sphi 0, %s27
      %s31 = sphi 0, %s30
      %s47 = sphi 0, %s31
      %s51 = sphi 0, %s51
      %s53 = sphi 0, %s51
      %s54 = sphi 0, %s53
      %s68 = sphi 0, %s54
      %s72 = sphi 0, %s72
      %s74 = sphi 0, %s72
      %s75 = sphi 0, %s74
      %s89 = sphi 0, %s75
      %s93 = sphi 0, %s93
      %s95 = sphi 0, %s93
      %s96 = sphi 0, %s95
      %s110 = sphi 0, %s96
      %s114 = sphi 0, %s114
      %s116 = sphi 0, %s114
      %s117 = sphi 0, %s116
      %s131 = sphi 0, %s117
      %s135 = sphi 0, %s135
      %s137 = sphi 0, %s135
      %s138 = sphi 0, %s137
      %s152 = sphi 0, %s138
      %s156 = sphi 0, %s156
      %s158 = sphi 0, %s156
      %s159 = sphi 0, %s158
      %s173 = sphi 0, %s159
      %s177 = sphi 0, %s177
      %s179 = sphi 0, %s177
      %s180 = sphi 0, %s179
      %s194 = sphi 0, %s180
      %s200 = sphi 0, %s202
      %s203 = sphi 0, %s200
      %s204 = sphi 0, %s203
      %s220 = sphi 0, %s204
    $region4: #{tpu_custom_call.1} parent=1 // loop_header_branch
      %20 = sbr.rel (%p18) target = $region8
    $region5: #{tpu_custom_call.1} parent=1 // loop_body
      %s22 = ssub.s32 %s17, 1
      %s23 = ssub.s32 %s17, 2
      %s24 = sadd.s32 %s17, 1
      %s25 = ssub.s32 %s17, %s24
      %p26 = scmp.eq.s32.totalorder %s25, 0
      %s28 = sadd.s32 %s27, 1
      %s29 = scalar_select %p26, %s27, %s28
      %p32 = pneg %p26
      %p33 = scmp.eq.s32.totalorder %s17, 1
      %p34 = por %p32, %p33
      %p35 = scmp.ne.s32.totalorder %s27, %s30
      %p36 = scmp.eq.s32.totalorder %s17, 0
      %p37 = por %p35, %p36
      %p38 = scmp.ne.s32.totalorder %s27, %s30
      %p39 = scmp.eq.s32.totalorder %s22, 1
      %p40 = por %p38, %p39
      %p41 = scmp.ne.s32.totalorder %s30, %s31
      %p42 = scmp.eq.s32.totalorder %s22, 0
      %p43 = por %p41, %p42
      %p44 = scmp.ne.s32.totalorder %s30, %s31
      %p45 = scmp.eq.s32.totalorder %s23, 1
      %p46 = por %p44, %p45
      %p48 = scmp.ne.s32.totalorder %s31, %s47
      %p49 = scmp.eq.s32.totalorder %s23, 0
      %p50 = por %p48, %p49
      %s52 = sadd.s32 %s51, 1
      %p55 = scmp.eq.s32.totalorder %s17, 1
      %p56 = scmp.ne.s32.totalorder %s51, %s53
      %p57 = scmp.eq.s32.totalorder %s17, 0
      %p58 = por %p56, %p57
      %p59 = scmp.ne.s32.totalorder %s51, %s53
      %p60 = scmp.eq.s32.totalorder %s22, 1
      %p61 = por %p59, %p60
      %p62 = scmp.ne.s32.totalorder %s53, %s54
      %p63 = scmp.eq.s32.totalorder %s22, 0
      %p64 = por %p62, %p63
      %p65 = scmp.ne.s32.totalorder %s53, %s54
      %p66 = scmp.eq.s32.totalorder %s23, 1
      %p67 = por %p65, %p66
      %p69 = scmp.ne.s32.totalorder %s54, %s68
      %p70 = scmp.eq.s32.totalorder %s23, 0
      %p71 = por %p69, %p70
      %s73 = sadd.s32 %s72, 1
      %p76 = scmp.eq.s32.totalorder %s17, 1
      %p77 = scmp.ne.s32.totalorder %s72, %s74
      %p78 = scmp.eq.s32.totalorder %s17, 0
      %p79 = por %p77, %p78
      %p80 = scmp.ne.s32.totalorder %s72, %s74
      %p81 = scmp.eq.s32.totalorder %s22, 1
      %p82 = por %p80, %p81
      %p83 = scmp.ne.s32.totalorder %s74, %s75
      %p84 = scmp.eq.s32.totalorder %s22, 0
      %p85 = por %p83, %p84
      %p86 = scmp.ne.s32.totalorder %s74, %s75
      %p87 = scmp.eq.s32.totalorder %s23, 1
      %p88 = por %p86, %p87
      %p90 = scmp.ne.s32.totalorder %s75, %s89
      %p91 = scmp.eq.s32.totalorder %s23, 0
      %p92 = por %p90, %p91
      %s94 = sadd.s32 %s93, 1
      %p97 = scmp.eq.s32.totalorder %s17, 1
      %p98 = scmp.ne.s32.totalorder %s93, %s95
      %p99 = scmp.eq.s32.totalorder %s17, 0
      %p100 = por %p98, %p99
      %p101 = scmp.ne.s32.totalorder %s93, %s95
      %p102 = scmp.eq.s32.totalorder %s22, 1
      %p103 = por %p101, %p102
      %p104 = scmp.ne.s32.totalorder %s95, %s96
      %p105 = scmp.eq.s32.totalorder %s22, 0
      %p106 = por %p104, %p105
      %p107 = scmp.ne.s32.totalorder %s95, %s96
      %p108 = scmp.eq.s32.totalorder %s23, 1
      %p109 = por %p107, %p108
      %p111 = scmp.ne.s32.totalorder %s96, %s110
      %p112 = scmp.eq.s32.totalorder %s23, 0
      %p113 = por %p111, %p112
      %s115 = sadd.s32 %s114, 1
      %p118 = scmp.eq.s32.totalorder %s17, 1
      %p119 = scmp.ne.s32.totalorder %s114, %s116
      %p120 = scmp.eq.s32.totalorder %s17, 0
      %p121 = por %p119, %p120
      %p122 = scmp.ne.s32.totalorder %s114, %s116
      %p123 = scmp.eq.s32.totalorder %s22, 1
      %p124 = por %p122, %p123
      %p125 = scmp.ne.s32.totalorder %s116, %s117
      %p126 = scmp.eq.s32.totalorder %s22, 0
      %p127 = por %p125, %p126
      %p128 = scmp.ne.s32.totalorder %s116, %s117
      %p129 = scmp.eq.s32.totalorder %s23, 1
      %p130 = por %p128, %p129
      %p132 = scmp.ne.s32.totalorder %s117, %s131
      %p133 = scmp.eq.s32.totalorder %s23, 0
      %p134 = por %p132, %p133
      %s136 = sadd.s32 %s135, 1
      %p139 = scmp.eq.s32.totalorder %s17, 1
      %p140 = scmp.ne.s32.totalorder %s135, %s137
      %p141 = scmp.eq.s32.totalorder %s17, 0
      %p142 = por %p140, %p141
      %p143 = scmp.ne.s32.totalorder %s135, %s137
      %p144 = scmp.eq.s32.totalorder %s22, 1
      %p145 = por %p143, %p144
      %p146 = scmp.ne.s32.totalorder %s137, %s138
      %p147 = scmp.eq.s32.totalorder %s22, 0
      %p148 = por %p146, %p147
      %p149 = scmp.ne.s32.totalorder %s137, %s138
      %p150 = scmp.eq.s32.totalorder %s23, 1
      %p151 = por %p149, %p150
      %p153 = scmp.ne.s32.totalorder %s138, %s152
      %p154 = scmp.eq.s32.totalorder %s23, 0
      %p155 = por %p153, %p154
      %s157 = sadd.s32 %s156, 1
      %p160 = scmp.eq.s32.totalorder %s17, 1
      %p161 = scmp.ne.s32.totalorder %s156, %s158
      %p162 = scmp.eq.s32.totalorder %s17, 0
      %p163 = por %p161, %p162
      %p164 = scmp.ne.s32.totalorder %s156, %s158
      %p165 = scmp.eq.s32.totalorder %s22, 1
      %p166 = por %p164, %p165
      %p167 = scmp.ne.s32.totalorder %s158, %s159
      %p168 = scmp.eq.s32.totalorder %s22, 0
      %p169 = por %p167, %p168
      %p170 = scmp.ne.s32.totalorder %s158, %s159
      %p171 = scmp.eq.s32.totalorder %s23, 1
      %p172 = por %p170, %p171
      %p174 = scmp.ne.s32.totalorder %s159, %s173
      %p175 = scmp.eq.s32.totalorder %s23, 0
      %p176 = por %p174, %p175
      %s178 = sadd.s32 %s177, 1
      %p181 = scmp.eq.s32.totalorder %s17, 1
      %p182 = scmp.ne.s32.totalorder %s177, %s179
      %p183 = scmp.eq.s32.totalorder %s17, 0
      %p184 = por %p182, %p183
      %p185 = scmp.ne.s32.totalorder %s177, %s179
      %p186 = scmp.eq.s32.totalorder %s22, 1
      %p187 = por %p185, %p186
      %p188 = scmp.ne.s32.totalorder %s179, %s180
      %p189 = scmp.eq.s32.totalorder %s22, 0
      %p190 = por %p188, %p189
      %p191 = scmp.ne.s32.totalorder %s179, %s180
      %p192 = scmp.eq.s32.totalorder %s23, 1
      %p193 = por %p191, %p192
      %p195 = scmp.ne.s32.totalorder %s180, %s194
      %p196 = scmp.eq.s32.totalorder %s23, 0
      %p197 = por %p195, %p196
      %s198 = ssub.s32 %s17, %s24
      %p199 = scmp.eq.s32.totalorder %s198, 0
      %s201 = sadd.s32 %s200, 1
      %s202 = scalar_select %p199, %s200, %s201
      %p205 = pneg %p199
      %p206 = scmp.eq.s32.totalorder %s17, 1
      %p207 = por %p205, %p206
      %p208 = scmp.ne.s32.totalorder %s200, %s203
      %p209 = scmp.eq.s32.totalorder %s17, 0
      %p210 = por %p208, %p209
      %p211 = scmp.ne.s32.totalorder %s200, %s203
      %p212 = scmp.eq.s32.totalorder %s22, 1
      %p213 = por %p211, %p212
      %p214 = scmp.ne.s32.totalorder %s203, %s204
      %p215 = scmp.eq.s32.totalorder %s22, 0
      %p216 = por %p214, %p215
      %p217 = scmp.ne.s32.totalorder %s203, %s204
      %p218 = scmp.eq.s32.totalorder %s23, 1
      %p219 = por %p217, %p218
      %p221 = scmp.ne.s32.totalorder %s204, %s220
      %p222 = scmp.eq.s32.totalorder %s23, 0
      %p223 = por %p221, %p222
      %p224 = scmp.le.s32.totalorder 1, %s17
      %p225 = scmp.lt.s32.totalorder %s17, 3
      %p226 = pnand %p224, %p225
      %p227 = pneg %p226
      // Predicated region
      $region9: #{tpu_custom_call.1} parent=5 // pred_check
        _
      $region10: #{tpu_custom_call.1} parent=5 // pred_check_branch
        %229 = sbr.rel (%p226) target = $region12
      $region11: #{tpu_custom_call.1} parent=5 // pred_region
        %s230 = ssub.s32 %s17, 1
        // Predicated region
        $region13: #{tpu_custom_call.1} parent=11 // pred_check
          %p231 = pneg %p64
        $region14: #{tpu_custom_call.1} parent=11 // pred_check_branch
          %233 = sbr.rel (%p231) target = $region16
        $region15: #{tpu_custom_call.1} parent=11 // pred_region
          _
        $region16: #{tpu_custom_call.1} parent=11 // pred_fallthru
          _
        // Predicated region
        $region17: #{tpu_custom_call.1} parent=11 // pred_check
          %p234 = pneg %p85
        $region18: #{tpu_custom_call.1} parent=11 // pred_check_branch
          %236 = sbr.rel (%p234) target = $region20
        $region19: #{tpu_custom_call.1} parent=11 // pred_region
          _
        $region20: #{tpu_custom_call.1} parent=11 // pred_fallthru
          _
        // Predicated region
        $region21: #{tpu_custom_call.1} parent=11 // pred_check
          %p237 = pneg %p106
        $region22: #{tpu_custom_call.1} parent=11 // pred_check_branch
          %239 = sbr.rel (%p237) target = $region24
        $region23: #{tpu_custom_call.1} parent=11 // pred_region
          _
        $region24: #{tpu_custom_call.1} parent=11 // pred_fallthru
          _
        // Predicated region
        $region25: #{tpu_custom_call.1} parent=11 // pred_check
          %p240 = pneg %p127
        $region26: #{tpu_custom_call.1} parent=11 // pred_check_branch
          %242 = sbr.rel (%p240) target = $region28
        $region27: #{tpu_custom_call.1} parent=11 // pred_region
          _
        $region28: #{tpu_custom_call.1} parent=11 // pred_fallthru
          _
        // Predicated region
        $region29: #{tpu_custom_call.1} parent=11 // pred_check
          %p243 = pneg %p148
        $region30: #{tpu_custom_call.1} parent=11 // pred_check_branch
          %245 = sbr.rel (%p243) target = $region32
        $region31: #{tpu_custom_call.1} parent=11 // pred_region
          _
        $region32: #{tpu_custom_call.1} parent=11 // pred_fallthru
          _
        // Predicated region
        $region33: #{tpu_custom_call.1} parent=11 // pred_check
          %p246 = pneg %p169
        $region34: #{tpu_custom_call.1} parent=11 // pred_check_branch
          %248 = sbr.rel (%p246) target = $region36
        $region35: #{tpu_custom_call.1} parent=11 // pred_region
          _
        $region36: #{tpu_custom_call.1} parent=11 // pred_fallthru
          _
        // Predicated region
        $region37: #{tpu_custom_call.1} parent=11 // pred_check
          %p249 = pneg %p190
        $region38: #{tpu_custom_call.1} parent=11 // pred_check_branch
          %251 = sbr.rel (%p249) target = $region40
        $region39: #{tpu_custom_call.1} parent=11 // pred_region
          _
        $region40: #{tpu_custom_call.1} parent=11 // pred_fallthru
          _
      $region12: #{tpu_custom_call.1} parent=5 // pred_fallthru
        _
      %p252 = scmp.lt.s32.totalorder %s17, 2
      // Predicated region
      $region41: #{tpu_custom_call.1} parent=5 // pred_check
        %p253 = pneg %p252
      $region42: #{tpu_custom_call.1} parent=5 // pred_check_branch
        %255 = sbr.rel (%p253) target = $region44
      $region43: #{tpu_custom_call.1} parent=5 // pred_region
        // Predicated region
        $region45: #{tpu_custom_call.1} parent=43 // pred_check
          %p256 = pneg %p37
        $region46: #{tpu_custom_call.1} parent=43 // pred_check_branch
          %258 = sbr.rel (%p256) target = $region48
        $region47: #{tpu_custom_call.1} parent=43 // pred_region
          %s259 = smul.u32 5, %s17
          %p260 = scmp.lt.s32.totalorder %s259, 9
          %s261 = scalar_select %p260, %s259, 9
          %s262 = smul.addr %s261, 8
          %s263 = scalar_lea.vmem %s0, %s262
          %s264 = smul.u32 5, %s17
        $region48: #{tpu_custom_call.1} parent=43 // pred_fallthru
          _
      $region44: #{tpu_custom_call.1} parent=5 // pred_fallthru
        _
      %p265 = scmp.le.s32.totalorder 1, %s17
      %p266 = scmp.lt.s32.totalorder %s17, 3
      %p267 = pnand %p265, %p266
      %p268 = pneg %p267
      // Predicated region
      $region49: #{tpu_custom_call.1} parent=5 // pred_check
        _
      $region50: #{tpu_custom_call.1} parent=5 // pred_check_branch
        %270 = sbr.rel (%p267) target = $region52
      $region51: #{tpu_custom_call.1} parent=5 // pred_region
        %s271 = ssub.s32 %s17, 1
        %s272 = smul.u32 5, %s22
        %p273 = scmp.lt.s32.totalorder %s272, 9
        %s274 = scalar_select %p273, %s272, 9
        %s275 = smul.addr %s274, 8
        %s276 = scalar_lea.vmem %s0, %s275
        %p277 = pneg %p43
        %p278 = pneg %p40
        %p279 = pneg %p64
        %p280 = pneg %p61
        %p281 = pneg %p85
        %p282 = pneg %p82
        %p283 = pneg %p106
        %p284 = pneg %p103
        %p285 = pneg %p127
        %p286 = pneg %p124
        %p287 = pneg %p148
        %p288 = pneg %p145
        %p289 = pneg %p169
        %p290 = pneg %p166
        %p291 = pneg %p190
        %p292 = pneg %p187
        %p293 = pneg %p216
        %p294 = pneg %p213
        %s295 = sand.u32 %s203, 1
        %s296 = scalar_lea.sflag [#allocation3], %s295
        %s297 = sand.u32 %s203, 1
        %s298 = smul.addr %s297, 40
        %s299 = scalar_lea.vmem [#allocation2], %s298
        %s300 = smul.u32 5, %s22
        %p301 = scmp.lt.s32.totalorder %s300, 9
        %s302 = scalar_select %p301, %s300, 9
        %s303 = smul.addr %s302, 8
        %s304 = scalar_lea.vmem %s0, %s303
        %s305 = smul.u32 5, %s22
        %s306 = smul.u32 5, %s22
        %v307 = vld [vmem:[%s2] sm:$0x1]
        %v308 = vld [vmem:[%s4] sm:$0x1]
        %v309 = vld [vmem:[%s5] sm:$0x1]
        %v310 = vld [vmem:[%s7] sm:$0x1]
        %v311 = vld [vmem:[%s304] sm:$0xff]
        %v312 = vld [vmem:[%s304 + $0x8] sm:$0xff]
        %v313 = vld [vmem:[%s304 + $0x10] sm:$0xff]
        %v314 = vld [vmem:[%s304 + $0x18] sm:$0xff]
        %v315 = vld [vmem:[%s304 + $0x20] sm:$0xff]
        %v316 = vld [vmem:[%s1] sm:$0xff]
        %v317 = vld [vmem:[%s1 + $0x8] sm:$0xff]
        %v319 = vlaneseq
        %v320 = vshrl.u32 %v319, 7
        %v321 = vsub.s32 0, %v320
        %v322 = vrot.slane %v307, %v321
        %vm324 = vcmask 130048
        %v326 = vsel %vm324, %v311, 0
        %v329 = vsel %vm324, %v312, 0
        %v332 = vsel %vm324, %v313, 0
        %v335 = vsel %vm324, %v314, 0
        %v338 = vsel %vm324, %v315, 0
        %340 = vmatprep.subr.mxu0 0.0
        %341 = vmatpush1.msra.mxu0 %v316
        %342 = vmatprep.subr.mxu0 0.0
        %343 = vmatpush1.msra.mxu0 %v317
        %344 = vmatprep.subr.mxu0 0.0
        %345 = vmatpush1.msra.mxu0 0.0
        %346 = vmatprep.subr.mxu0 0.0
        %347 = vmatpush1.msra.mxu0 0.0
        %348 = vmatprep.subr.mxu0 0.0
        %349 = vmatpush1.msra.mxu0 0.0
        %350 = vmatprep.subr.mxu0 0.0
        %351 = vmatpush1.msra.mxu0 0.0
        %352 = vmatprep.subr.mxu0 0.0
        %353 = vmatpush1.msra.mxu0 0.0
        %354 = vmatprep.subr.mxu0 0.0
        %355 = vmatpush1.msra.mxu0 0.0
        %356 = vmatprep.subr.mxu0 0.0
        %357 = vmatpush1.msra.mxu0 0.0
        %358 = vmatprep.subr.mxu0 0.0
        %359 = vmatpush1.msra.mxu0 0.0
        %360 = vmatprep.subr.mxu0 0.0
        %361 = vmatpush1.msra.mxu0 0.0
        %362 = vmatprep.subr.mxu0 0.0
        %363 = vmatpush1.msra.mxu0 0.0
        %364 = vmatprep.subr.mxu0 0.0
        %365 = vmatpush1.msra.mxu0 0.0
        %366 = vmatprep.subr.mxu0 0.0
        %367 = vmatpush1.msra.mxu0 0.0
        %368 = vmatprep.subr.mxu0 0.0
        %369 = vmatpush1.msra.mxu0 0.0
        %370 = vmatprep.subr.mxu0 0.0
        %371 = vmatpush1.msra.mxu0 0.0
        %372 = vmatprep.subr.mxu0 0.0
        %373 = vmatpush1.msra.mxu0 0.0
        %374 = vmatprep.subr.mxu0 0.0
        %375 = vmatpush1.msra.mxu0 0.0
        %376 = vmatprep.subr.mxu0 0.0
        %377 = vmatpush1.msra.mxu0 0.0
        %378 = vmatprep.subr.mxu0 0.0
        %379 = vmatpush1.msra.mxu0 0.0
        %380 = vmatprep.subr.mxu0 0.0
        %381 = vmatpush1.msra.mxu0 0.0
        %382 = vmatprep.subr.mxu0 0.0
        %383 = vmatpush1.msra.mxu0 0.0
        %384 = vmatprep.subr.mxu0 0.0
        %385 = vmatpush1.msra.mxu0 0.0
        %386 = vmatprep.subr.mxu0 0.0
        %387 = vmatpush1.msra.mxu0 0.0
        %388 = vmatprep.subr.mxu0 0.0
        %389 = vmatpush1.msra.mxu0 0.0
        %390 = vmatprep.subr.mxu0 0.0
        %391 = vmatpush1.msra.mxu0 0.0
        %392 = vmatprep.subr.mxu0 0.0
        %393 = vmatpush1.msra.mxu0 0.0
        %394 = vmatprep.subr.mxu0 0.0
        %395 = vmatpush1.msra.mxu0 0.0
        %396 = vmatprep.subr.mxu0 0.0
        %397 = vmatpush1.msra.mxu0 0.0
        %398 = vmatprep.subr.mxu0 0.0
        %399 = vmatpush1.msra.mxu0 0.0
        %400 = vmatprep.subr.mxu0 0.0
        %401 = vmatpush1.msra.mxu0 0.0
        %402 = vmatprep.subr.mxu0 0.0
        %403 = vmatpush1.msra.mxu0 0.0
        %404 = vmatprep.mubr.f32.mxu0 0.0
        %405 = vmatmul.mubr.f32.gmra.mrb[0].mxu0 %v326
        %v406 = vpop.f32.mrb[0].mxu0
        %v407 = vadd.f32 %v322, %v406
        %v408 = vpop.f32.mrb[0].mxu0
        %409 = vmatprep.mubr.f32.mxu0 0.0
        %410 = vmatmul.mubr.f32.gmra.mrb[0].mxu0 %v329
        %v411 = vpop.f32.mrb[0].mxu0
        %v412 = vadd.f32 %v322, %v411
        %v413 = vpop.f32.mrb[0].mxu0
        %414 = vmatprep.mubr.f32.mxu0 0.0
        %415 = vmatmul.mubr.f32.gmra.mrb[0].mxu0 %v332
        %v416 = vpop.f32.mrb[0].mxu0
        %v417 = vadd.f32 %v322, %v416
        %v418 = vpop.f32.mrb[0].mxu0
        %419 = vmatprep.mubr.f32.mxu0 0.0
        %420 = vmatmul.mubr.f32.gmra.mrb[0].mxu0 %v335
        %v421 = vpop.f32.mrb[0].mxu0
        %v422 = vadd.f32 %v322, %v421
        %v423 = vpop.f32.mrb[0].mxu0
        %424 = vmatprep.mubr.f32.mxu0 0.0
        %425 = vmatmul.mubr.f32.gmra.mrb[0].mxu0 %v338
        %v426 = vpop.f32.mrb[0].mxu0
        %v427 = vadd.f32 %v322, %v426
        %v428 = vpop.f32.mrb[0].mxu0
        %429 = vdwg.mxu0
        %vm430 = vcmp.ge.f32.partialorder %v407, 0.0
        %vm431 = vcmp.ge.f32.partialorder %v412, 0.0
        %vm432 = vcmp.ge.f32.partialorder %v417, 0.0
        %vm433 = vcmp.ge.f32.partialorder %v422, 0.0
        %vm434 = vcmp.ge.f32.partialorder %v427, 0.0
        %v435 = vmul.f32 %v407, 0.01
        %v436 = vmul.f32 %v412, 0.01
        %v437 = vmul.f32 %v417, 0.01
        %v438 = vmul.f32 %v422, 0.01
        %v439 = vmul.f32 %v427, 0.01
        %v440 = vsel %vm430, %v407, %v435
        %v441 = vsel %vm431, %v412, %v436
        %v442 = vsel %vm432, %v417, %v437
        %v443 = vsel %vm433, %v422, %v438
        %v444 = vsel %vm434, %v427, %v439
        %v445 = vld [vmem:[%s3] sm:$0xff]
        %v446 = vld [vmem:[%s3 + $0x8] sm:$0xff]
        %v447 = vld [vmem:[%s3 + $0x10] sm:$0xff]
        %v448 = vld [vmem:[%s3 + $0x18] sm:$0xff]
        %v450 = vlaneseq
        %v451 = vshrl.u32 %v450, 7
        %v452 = vsub.s32 0, %v451
        %v453 = vrot.slane %v308, %v452
        %vm455 = vcmask 261120
        %v457 = vsel %vm455, %v440, 0
        %v460 = vsel %vm455, %v441, 0
        %v463 = vsel %vm455, %v442, 0
        %v466 = vsel %vm455, %v443, 0
        %v469 = vsel %vm455, %v444, 0
        %471 = vmatprep.subr.mxu0 0.0
        %472 = vmatpush1.msra.mxu0 %v445
        %473 = vmatprep.subr.mxu0 0.0
        %474 = vmatpush1.msra.mxu0 %v446
        %475 = vmatprep.subr.mxu0 0.0
        %476 = vmatpush1.msra.mxu0 %v447
        %477 = vmatprep.subr.mxu0 0.0
        %478 = vmatpush1.msra.mxu0 %v448
        %479 = vmatprep.subr.mxu0 0.0
        %480 = vmatpush1.msra.mxu0 0.0
        %481 = vmatprep.subr.mxu0 0.0
        %482 = vmatpush1.msra.mxu0 0.0
        %483 = vmatprep.subr.mxu0 0.0
        %484 = vmatpush1.msra.mxu0 0.0
        %485 = vmatprep.subr.mxu0 0.0
        %486 = vmatpush1.msra.mxu0 0.0
        %487 = vmatprep.subr.mxu0 0.0
        %488 = vmatpush1.msra.mxu0 0.0
        %489 = vmatprep.subr.mxu0 0.0
        %490 = vmatpush1.msra.mxu0 0.0
        %491 = vmatprep.subr.mxu0 0.0
        %492 = vmatpush1.msra.mxu0 0.0
        %493 = vmatprep.subr.mxu0 0.0
        %494 = vmatpush1.msra.mxu0 0.0
        %495 = vmatprep.subr.mxu0 0.0
        %496 = vmatpush1.msra.mxu0 0.0
        %497 = vmatprep.subr.mxu0 0.0
        %498 = vmatpush1.msra.mxu0 0.0
        %499 = vmatprep.subr.mxu0 0.0
        %500 = vmatpush1.msra.mxu0 0.0
        %501 = vmatprep.subr.mxu0 0.0
        %502 = vmatpush1.msra.mxu0 0.0
        %503 = vmatprep.subr.mxu0 0.0
        %504 = vmatpush1.msra.mxu0 0.0
        %505 = vmatprep.subr.mxu0 0.0
        %506 = vmatpush1.msra.mxu0 0.0
        %507 = vmatprep.subr.mxu0 0.0
        %508 = vmatpush1.msra.mxu0 0.0
        %509 = vmatprep.subr.mxu0 0.0
        %510 = vmatpush1.msra.mxu0 0.0
        %511 = vmatprep.subr.mxu0 0.0
        %512 = vmatpush1.msra.mxu0 0.0
        %513 = vmatprep.subr.mxu0 0.0
        %514 = vmatpush1.msra.mxu0 0.0
        %515 = vmatprep.subr.mxu0 0.0
        %516 = vmatpush1.msra.mxu0 0.0
        %517 = vmatprep.subr.mxu0 0.0
        %518 = vmatpush1.msra.mxu0 0.0
        %519 = vmatprep.subr.mxu0 0.0
        %520 = vmatpush1.msra.mxu0 0.0
        %521 = vmatprep.subr.mxu0 0.0
        %522 = vmatpush1.msra.mxu0 0.0
        %523 = vmatprep.subr.mxu0 0.0
        %524 = vmatpush1.msra.mxu0 0.0
        %525 = vmatprep.subr.mxu0 0.0
        %526 = vmatpush1.msra.mxu0 0.0
        %527 = vmatprep.subr.mxu0 0.0
        %528 = vmatpush1.msra.mxu0 0.0
        %529 = vmatprep.subr.mxu0 0.0
        %530 = vmatpush1.msra.mxu0 0.0
        %531 = vmatprep.subr.mxu0 0.0
        %532 = vmatpush1.msra.mxu0 0.0
        %533 = vmatprep.subr.mxu0 0.0
        %534 = vmatpush1.msra.mxu0 0.0
        %535 = vmatprep.mubr.f32.mxu0 0.0
        %536 = vmatmul.mubr.f32.gmra.mrb[0].mxu0 %v457
        %v537 = vpop.f32.mrb[0].mxu0
        %v538 = vadd.f32 %v453, %v537
        %v539 = vpop.f32.mrb[0].mxu0
        %540 = vmatprep.mubr.f32.mxu0 0.0
        %541 = vmatmul.mubr.f32.gmra.mrb[0].mxu0 %v460
        %v542 = vpop.f32.mrb[0].mxu0
        %v543 = vadd.f32 %v453, %v542
        %v544 = vpop.f32.mrb[0].mxu0
        %545 = vmatprep.mubr.f32.mxu0 0.0
        %546 = vmatmul.mubr.f32.gmra.mrb[0].mxu0 %v463
        %v547 = vpop.f32.mrb[0].mxu0
        %v548 = vadd.f32 %v453, %v547
        %v549 = vpop.f32.mrb[0].mxu0
        %550 = vmatprep.mubr.f32.mxu0 0.0
        %551 = vmatmul.mubr.f32.gmra.mrb[0].mxu0 %v466
        %v552 = vpop.f32.mrb[0].mxu0
        %v553 = vadd.f32 %v453, %v552
        %v554 = vpop.f32.mrb[0].mxu0
        %555 = vmatprep.mubr.f32.mxu0 0.0
        %556 = vmatmul.mubr.f32.gmra.mrb[0].mxu0 %v469
        %v557 = vpop.f32.mrb[0].mxu0
        %v558 = vadd.f32 %v453, %v557
        %v559 = vpop.f32.mrb[0].mxu0
        %560 = vdwg.mxu0
        %vm561 = vcmp.ge.f32.partialorder %v538, 0.0
        %vm562 = vcmp.ge.f32.partialorder %v543, 0.0
        %vm563 = vcmp.ge.f32.partialorder %v548, 0.0
        %vm564 = vcmp.ge.f32.partialorder %v553, 0.0
        %vm565 = vcmp.ge.f32.partialorder %v558, 0.0
        %v567 = vlaneseq
        %v568 = vshrl.u32 %v567, 7
        %v569 = vsub.s32 0, %v568
        %v570 = vrot.slane %v309, %v569
        %v572 = vmul.f32 %v570, %v538
        %v573 = vmul.f32 %v570, %v543
        %v574 = vmul.f32 %v570, %v548
        %v575 = vmul.f32 %v570, %v553
        %v576 = vmul.f32 %v570, %v558
        %v577 = vsel %vm561, %v538, %v572
        %v578 = vsel %vm562, %v543, %v573
        %v579 = vsel %vm563, %v548, %v574
        %v580 = vsel %vm564, %v553, %v575
        %v581 = vsel %vm565, %v558, %v576
        %v582 = vld [vmem:[%s6] sm:$0xff]
        %v583 = vld [vmem:[%s6 + $0x8] sm:$0xff]
        %v584 = vld [vmem:[%s6 + $0x10] sm:$0xff]
        %v585 = vld [vmem:[%s6 + $0x18] sm:$0xff]
        %v587 = vlaneseq
        %v588 = vshrl.u32 %v587, 7
        %v589 = vsub.s32 0, %v588
        %v590 = vrot.slane %v310, %v589
        %v593 = vsel %vm455, %v577, 0
        %v596 = vsel %vm455, %v578, 0
        %v599 = vsel %vm455, %v579, 0
        %v602 = vsel %vm455, %v580, 0
        %v605 = vsel %vm455, %v581, 0
        %607 = vmatprep.subr.mxu0 0.0
        %608 = vmatpush1.msra.mxu0 %v582
        %609 = vmatprep.subr.mxu0 0.0
        %610 = vmatpush1.msra.mxu0 %v583
        %611 = vmatprep.subr.mxu0 0.0
        %612 = vmatpush1.msra.mxu0 %v584
        %613 = vmatprep.subr.mxu0 0.0
        %614 = vmatpush1.msra.mxu0 %v585
        %615 = vmatprep.subr.mxu0 0.0
        %616 = vmatpush1.msra.mxu0 0.0
        %617 = vmatprep.subr.mxu0 0.0
        %618 = vmatpush1.msra.mxu0 0.0
        %619 = vmatprep.subr.mxu0 0.0
        %620 = vmatpush1.msra.mxu0 0.0
        %621 = vmatprep.subr.mxu0 0.0
        %622 = vmatpush1.msra.mxu0 0.0
        %623 = vmatprep.subr.mxu0 0.0
        %624 = vmatpush1.msra.mxu0 0.0
        %625 = vmatprep.subr.mxu0 0.0
        %626 = vmatpush1.msra.mxu0 0.0
        %627 = vmatprep.subr.mxu0 0.0
        %628 = vmatpush1.msra.mxu0 0.0
        %629 = vmatprep.subr.mxu0 0.0
        %630 = vmatpush1.msra.mxu0 0.0
        %631 = vmatprep.subr.mxu0 0.0
        %632 = vmatpush1.msra.mxu0 0.0
        %633 = vmatprep.subr.mxu0 0.0
        %634 = vmatpush1.msra.mxu0 0.0
        %635 = vmatprep.subr.mxu0 0.0
        %636 = vmatpush1.msra.mxu0 0.0
        %637 = vmatprep.subr.mxu0 0.0
        %638 = vmatpush1.msra.mxu0 0.0
        %639 = vmatprep.subr.mxu0 0.0
        %640 = vmatpush1.msra.mxu0 0.0
        %641 = vmatprep.subr.mxu0 0.0
        %642 = vmatpush1.msra.mxu0 0.0
        %643 = vmatprep.subr.mxu0 0.0
        %644 = vmatpush1.msra.mxu0 0.0
        %645 = vmatprep.subr.mxu0 0.0
        %646 = vmatpush1.msra.mxu0 0.0
        %647 = vmatprep.subr.mxu0 0.0
        %648 = vmatpush1.msra.mxu0 0.0
        %649 = vmatprep.subr.mxu0 0.0
        %650 = vmatpush1.msra.mxu0 0.0
        %651 = vmatprep.subr.mxu0 0.0
        %652 = vmatpush1.msra.mxu0 0.0
        %653 = vmatprep.subr.mxu0 0.0
        %654 = vmatpush1.msra.mxu0 0.0
        %655 = vmatprep.subr.mxu0 0.0
        %656 = vmatpush1.msra.mxu0 0.0
        %657 = vmatprep.subr.mxu0 0.0
        %658 = vmatpush1.msra.mxu0 0.0
        %659 = vmatprep.subr.mxu0 0.0
        %660 = vmatpush1.msra.mxu0 0.0
        %661 = vmatprep.subr.mxu0 0.0
        %662 = vmatpush1.msra.mxu0 0.0
        %663 = vmatprep.subr.mxu0 0.0
        %664 = vmatpush1.msra.mxu0 0.0
        %665 = vmatprep.subr.mxu0 0.0
        %666 = vmatpush1.msra.mxu0 0.0
        %667 = vmatprep.subr.mxu0 0.0
        %668 = vmatpush1.msra.mxu0 0.0
        %669 = vmatprep.subr.mxu0 0.0
        %670 = vmatpush1.msra.mxu0 0.0
        %671 = vmatprep.mubr.f32.mxu0 0.0
        %672 = vmatmul.mubr.f32.gmra.mrb[0].mxu0 %v593
        %v673 = vpop.f32.mrb[0].mxu0
        %v674 = vadd.f32 %v590, %v673
        %v675 = vpop.f32.mrb[0].mxu0
        %676 = vmatprep.mubr.f32.mxu0 0.0
        %677 = vmatmul.mubr.f32.gmra.mrb[0].mxu0 %v596
        %v678 = vpop.f32.mrb[0].mxu0
        %v679 = vadd.f32 %v590, %v678
        %v680 = vpop.f32.mrb[0].mxu0
        %681 = vmatprep.mubr.f32.mxu0 0.0
        %682 = vmatmul.mubr.f32.gmra.mrb[0].mxu0 %v599
        %v683 = vpop.f32.mrb[0].mxu0
        %v684 = vadd.f32 %v590, %v683
        %v685 = vpop.f32.mrb[0].mxu0
        %686 = vmatprep.mubr.f32.mxu0 0.0
        %687 = vmatmul.mubr.f32.gmra.mrb[0].mxu0 %v602
        %v688 = vpop.f32.mrb[0].mxu0
        %v689 = vadd.f32 %v590, %v688
        %v690 = vpop.f32.mrb[0].mxu0
        %691 = vmatprep.mubr.f32.mxu0 0.0
        %692 = vmatmul.mubr.f32.gmra.mrb[0].mxu0 %v605
        %v693 = vpop.f32.mrb[0].mxu0
        %v694 = vadd.f32 %v590, %v693
        %v695 = vpop.f32.mrb[0].mxu0
        %696 = vdwg.mxu0
        %697 = vst [vmem:[%s299] sm:$0xff] %v674
        %698 = vst [vmem:[%s299 + $0x8] sm:$0xff] %v679
        %699 = vst [vmem:[%s299 + $0x10] sm:$0xff] %v684
        %700 = vst [vmem:[%s299 + $0x18] sm:$0xff] %v689
        %701 = vst [vmem:[%s299 + $0x20] sm:$0xff] %v694
        %s702 = sand.u32 %s203, 1
        %s703 = scalar_lea.sflag [#allocation3], %s702
        %s704 = sand.u32 %s203, 1
        %s705 = smul.addr %s704, 40
        %s706 = scalar_lea.vmem [#allocation2], %s705
        // Predicated region
        $region53: #{tpu_custom_call.1} parent=51 // pred_check
          %p707 = pneg %p213
        $region54: #{tpu_custom_call.1} parent=51 // pred_check_branch
          %709 = sbr.rel (%p707) target = $region56
        $region55: #{tpu_custom_call.1} parent=51 // pred_region
          %s710 = smul.u32 5, %s22
          %s712 = ssub.s32 640, 640
          %713 = vsyncadd %s703, %s712
          %s714 = smul.addr %s710, 128
          %s715 = scalar_lea.hbm %s8, %s714
          %s716 = sshll.u32 %s706, 4
          %s717 = int_to_ptr.vmem [resolvable:$true] %s716
          %722 = dma.vmem_to_hbm [thread:$0]  %s717, 640, %s715, %s703, 128, 128, 8
        $region56: #{tpu_custom_call.1} parent=51 // pred_fallthru
          _
      $region52: #{tpu_custom_call.1} parent=5 // pred_fallthru
        _
      %p723 = scmp.le.s32.totalorder 2, %s17
      // Predicated region
      $region57: #{tpu_custom_call.1} parent=5 // pred_check
        %p724 = pneg %p723
      $region58: #{tpu_custom_call.1} parent=5 // pred_check_branch
        %726 = sbr.rel (%p724) target = $region60
      $region59: #{tpu_custom_call.1} parent=5 // pred_region
        %s727 = ssub.s32 %s17, 2
        // Predicated region
        $region61: #{tpu_custom_call.1} parent=59 // pred_check
          %p728 = pneg %p219
        $region62: #{tpu_custom_call.1} parent=59 // pred_check_branch
          %730 = sbr.rel (%p728) target = $region64
        $region63: #{tpu_custom_call.1} parent=59 // pred_region
          %s731 = sand.u32 %s204, 1
          %s732 = scalar_lea.sflag [#allocation3], %s731
          %s733 = sand.u32 %s204, 1
          %s734 = smul.addr %s733, 40
          %s735 = scalar_lea.vmem [#allocation2], %s734
          %736 = dma.done %s732, 640
        $region64: #{tpu_custom_call.1} parent=59 // pred_fallthru
          _
      $region60: #{tpu_custom_call.1} parent=5 // pred_fallthru
        _
    $region6: #{tpu_custom_call.1} parent=1 // loop_footer
      %s21 = sadd.s32 1, %s17
    $region7: #{tpu_custom_call.1} parent=1 // loop_footer_branch
      %16 = sbr.rel target = $region3
    $region8: #{tpu_custom_call.1} parent=1 // loop_exit
      _
    %737 = vsyncpa [#allocation3], 1
    %s738 = scalar_lea.sflag [#allocation3], 1
    %739 = vsyncpa %s738, 1

</llo_original>
